<compile_context>
chip_gen: v5e
topology: v5e:2x2
jax: 0.10.0
libtpu: 0.0.40
codegen_flags: <defaults>
</compile_context>

<pallas_src>
import jax
import jax.numpy as jnp
from jax.experimental import pallas as pl
from jax.experimental.pallas import tpu as pltpu


def _round_up(x: int, m: int) -> int:
    return ((x + m - 1) // m) * m


def _choose_tile_d(d: int) -> int:
    """Lane-axis block. Keep full rows (contiguous DMA, one D step) unless D is
    a very wide 128-multiple, in which case split to bound live vregs."""
    DCAP = 2048
    if d <= DCAP or d % 128 != 0:
        return d
    for cand in range(DCAP, 511, -128):   # only accept reasonably wide strips
        if d % cand == 0:
            return cand
    return d


def _choose_tile_n(n: int, dblk: int, itemsize: int) -> int:
    """Row tile for the streaming reduction: multiple of the sublane packing
    (8 f32 / 16 bf16), <= 8 MiB per (double-buffered) input buffer, <= 1024
    rows (~86% of HBM roofline measured for tiled streaming on v6e)."""
    sub = 8 * max(1, 4 // itemsize)
    budget = 8 * 1024 * 1024
    cap = max(sub, (budget // max(1, dblk * itemsize)) // sub * sub)
    cap = min(cap, 1024)
    return min(cap, _round_up(n, sub))


def _make_avg_kernel(tn: int, dblk: int, n_total: int, needs_mask: bool,
                     use_mxu_fold: bool):
    groups = tn // 8   # tn is always a multiple of 8

    def _valu_fold(x):
        # (tn, dblk) -> (8, dblk) by adding row groups of whole vregs (VALU only).
        if groups > 1:
            x = jnp.sum(x.reshape(groups, 8, dblk), axis=0)
        return x

    def kernel(x_ref, o_ref, acc_ref):
        k = pl.program_id(1)                   # reduction (N) axis, last grid dim
        last = pl.num_programs(1) - 1

        @pl.when(k == 0)
        def _init():
            acc_ref[...] = jnp.zeros_like(acc_ref)

        def _full_tile():
            if use_mxu_fold:
                # Fold rows on the idle MXU. 1/8 weight (exact power of two) so
                # the 8 result rows sum to exactly the column sum; no zero
                # weights, so Inf data stays Inf like the reference.
                w = jnp.full((8, tn), 0.125, dtype=x_ref.dtype)
                acc_ref[...] += jnp.dot(w, x_ref[...],
                                        preferred_element_type=jnp.float32)
            else:
                acc_ref[...] += _valu_fold(x_ref[...]).astype(jnp.float32)

        if needs_mask:
            @pl.when(k != last)
            def _body_full():
                _full_tile()

            @pl.when(k == last)
            def _body_tail():
                # Ragged tail: OOB rows are unspecified (possibly NaN/Inf), so
                # they must be removed with a select, never a 0-multiply.
                x = x_ref[...].astype(jnp.float32)
                row = jax.lax.broadcasted_iota(jnp.int32, (tn, 1), 0) + k * tn
                x = jnp.where(row < n_total, x, 0.0)
                acc_ref[...] += _valu_fold(x)
        else:
            _full_tile()

        @pl.when(k == last)
        def _finalize():
            total = jnp.sum(acc_ref[...], axis=0, keepdims=True)  # one XLU reduce
            o_ref[...] = (total * (1.0 / n_total)).astype(o_ref.dtype)

    return kernel


def avg_aggregator(fvs: jax.Array) -> jax.Array:
    """Pallas equivalent of AvgAggregator.forward: (N, D) -> (1, D)."""
    n, d = fvs.shape

    # Tiny inputs: fixed pallas_call / grid-step overhead dominates; let XLA fuse.
    if n * d <= 4096:
        return jnp.mean(fvs, axis=0, keepdims=True)

    dblk = _choose_tile_d(d)
    tn = _choose_tile_n(n, dblk, fvs.dtype.itemsize)
    grid_d = d // dblk
    grid_n = pl.cdiv(n, tn)
    needs_mask = (n % tn) != 0
    use_mxu_fold = fvs.dtype.itemsize < 4   # bf16/fp16/fp8: cast+adds would eat VALU

    kernel = _make_avg_kernel(tn, dblk, n, needs_mask, use_mxu_fold)

    return pl.pallas_call(
        kernel,
        out_shape=jax.ShapeDtypeStruct((1, d), fvs.dtype),
        grid=(grid_d, grid_n),
        in_specs=[pl.BlockSpec((tn, dblk), lambda j, k: (k, j))],
        # Output block constant along the reduction axis -> stays VMEM-resident.
        out_specs=pl.BlockSpec((1, dblk), lambda j, k: (0, j)),
        scratch_shapes=[pltpu.VMEM((8, dblk), jnp.float32)],
        compiler_params=pltpu.CompilerParams(
            dimension_semantics=("parallel", "arbitrary"),
            vmem_limit_bytes=32 * 1024 * 1024,
        ),
    )(fvs)


if __name__ == "__main__":
    k1, k2, k3 = jax.random.split(jax.random.PRNGKey(0), 3)

    # 1) Module-scale shape (N=8 feature vectors, hidden=32) -> trivial fast path.
    fvs = jax.random.normal(k1, (8, 32), dtype=jnp.float32)
    out = jax.block_until_ready(avg_aggregator(fvs))
    ref = jnp.expand_dims(jnp.mean(fvs, axis=0), axis=0)
    assert out.shape == (1, 32), out.shape
    assert jnp.allclose(out, ref, atol=1e-5, rtol=1e-5), "mismatch (fast path)"

    # 2) Streaming Pallas path, f32 VALU fold, masked ragged tail (1030 = 1024 + 6).
    fvs2 = jax.random.normal(k2, (1030, 256), dtype=jnp.float32)
    out2 = jax.block_until_ready(avg_aggregator(fvs2))
    ref2 = jnp.mean(fvs2, axis=0, keepdims=True)
    assert out2.shape == (1, 256), out2.shape
    assert jnp.allclose(out2, ref2, atol=1e-4, rtol=1e-4), "mismatch (ragged f32)"

    # 3) Streaming Pallas path, bf16 MXU fold, two full tiles, no mask.
    fvs3 = jax.random.normal(k3, (2048, 256), dtype=jnp.float32).astype(jnp.bfloat16)
    out3 = jax.block_until_ready(avg_aggregator(fvs3))
    ref3 = jnp.mean(fvs3.astype(jnp.float32), axis=0, keepdims=True)
    assert out3.shape == (1, 256), out3.shape
    assert jnp.allclose(out3.astype(jnp.float32), ref3, atol=5e-3, rtol=5e-3), \
        "mismatch (bf16 MXU fold)"

    print("KERNEL_OK")
</pallas_src>

<mosaic_0001>
module attributes {stable_mosaic.version = 11 : i64} {
  func.func @kernel(%arg0: i32, %arg1: i32, %arg2: memref<1024x256xf32, #tpu.memory_space<vmem>>, %arg3: memref<1x256xf32, #tpu.memory_space<vmem>>, %arg4: memref<8x256xf32, #tpu.memory_space<vmem>>) attributes {dimension_semantics = [#tpu.dimension_semantics<parallel>, #tpu.dimension_semantics<arbitrary>], iteration_bounds = array<i64: 1, 2>, scalar_prefetch = 0 : i64, scratch_operands = 1 : i64, tpu.core_type = #tpu.core_type<tc>, window_params = [{transform_indices = @transform_0, window_bounds = array<i64: 1024, 256>}, {transform_indices = @transform_1, window_bounds = array<i64: 1, 256>}]} {
    %c0_i32 = arith.constant 0 : i32
    %0 = arith.cmpi eq, %arg1, %c0_i32 : i32
    %1 = arith.extui %0 : i1 to i32
    %c0_i32_0 = arith.constant 0 : i32
    %2 = arith.cmpi ne, %1, %c0_i32_0 : i32
    scf.if %2 {
      %cst = arith.constant 0.000000e+00 : f32
      %12 = vector.broadcast %cst : f32 to vector<8x256xf32>
      %c0 = arith.constant 0 : index
      %c0_6 = arith.constant 0 : index
      %13 = vector.load %arg4[%c0, %c0_6] : memref<8x256xf32, #tpu.memory_space<vmem>>, vector<8x256xf32>
      tpu.vector_store %arg4[%c0, %c0_6], %12 {strides = array<i32>} : memref<8x256xf32, #tpu.memory_space<vmem>>, vector<8x256xf32>,
    } else {
    }
    %c1_i32 = arith.constant 1 : i32
    %3 = arith.cmpi ne, %arg1, %c1_i32 : i32
    %4 = arith.extui %3 : i1 to i32
    %c0_i32_1 = arith.constant 0 : i32
    %5 = arith.cmpi ne, %4, %c0_i32_1 : i32
    scf.if %5 {
      %c0 = arith.constant 0 : index
      %c0_6 = arith.constant 0 : index
      %12 = vector.load %arg4[%c0, %c0_6] : memref<8x256xf32, #tpu.memory_space<vmem>>, vector<8x256xf32>
      %c0_7 = arith.constant 0 : index
      %c0_8 = arith.constant 0 : index
      %13 = vector.load %arg2[%c0_7, %c0_8] : memref<1024x256xf32, #tpu.memory_space<vmem>>, vector<1024x256xf32>
      %14 = vector.shape_cast %13 : vector<1024x256xf32> to vector<128x8x256xf32>
      %cst = arith.constant dense<0.000000e+00> : vector<8x256xf32>
      %15 = vector.multi_reduction <add>, %14, %cst [0] : vector<128x8x256xf32> to vector<8x256xf32>
      %16 = arith.addf %12, %15 : vector<8x256xf32>
      %c0_9 = arith.constant 0 : index
      %c0_10 = arith.constant 0 : index
      %17 = vector.load %arg4[%c0_9, %c0_10] : memref<8x256xf32, #tpu.memory_space<vmem>>, vector<8x256xf32>
      tpu.vector_store %arg4[%c0_9, %c0_10], %16 {strides = array<i32>} : memref<8x256xf32, #tpu.memory_space<vmem>>, vector<8x256xf32>,
    } else {
    }
    %c1_i32_2 = arith.constant 1 : i32
    %6 = arith.cmpi eq, %arg1, %c1_i32_2 : i32
    %7 = arith.extui %6 : i1 to i32
    %c0_i32_3 = arith.constant 0 : i32
    %8 = arith.cmpi ne, %7, %c0_i32_3 : i32
    scf.if %8 {
      %c0 = arith.constant 0 : index
      %c0_6 = arith.constant 0 : index
      %12 = vector.load %arg2[%c0, %c0_6] : memref<1024x256xf32, #tpu.memory_space<vmem>>, vector<1024x256xf32>
      %13 = tpu.iota {dimensions = array<i32: 0>} : vector<1024x1xi32>
      %c1024_i32 = arith.constant 1024 : i32
      %14 = arith.muli %arg1, %c1024_i32 : i32
      %15 = vector.broadcast %14 : i32 to vector<1024x1xi32>
      %16 = arith.addi %13, %15 : vector<1024x1xi32>
      %c1030_i32 = arith.constant 1030 : i32
      %17 = vector.broadcast %c1030_i32 : i32 to vector<1024x1xi32>
      %18 = arith.cmpi slt, %16, %17 : vector<1024x1xi32>
      %cst = arith.constant 0.000000e+00 : f32
      %19 = vector.shape_cast %18 : vector<1024x1xi1> to vector<1024x1xi1>
      %20 = vector.broadcast %19 : vector<1024x1xi1> to vector<1024x256xi1>
      %21 = vector.broadcast %cst : f32 to vector<1024x256xf32>
      %22 = arith.select %20, %12, %21 : vector<1024x256xi1>, vector<1024x256xf32>
      %c0_7 = arith.constant 0 : index
      %c0_8 = arith.constant 0 : index
      %23 = vector.load %arg4[%c0_7, %c0_8] : memref<8x256xf32, #tpu.memory_space<vmem>>, vector<8x256xf32>
      %24 = vector.shape_cast %22 : vector<1024x256xf32> to vector<128x8x256xf32>
      %cst_9 = arith.constant dense<0.000000e+00> : vector<8x256xf32>
      %25 = vector.multi_reduction <add>, %24, %cst_9 [0] : vector<128x8x256xf32> to vector<8x256xf32>
      %26 = arith.addf %23, %25 : vector<8x256xf32>
      %c0_10 = arith.constant 0 : index
      %c0_11 = arith.constant 0 : index
      %27 = vector.load %arg4[%c0_10, %c0_11] : memref<8x256xf32, #tpu.memory_space<vmem>>, vector<8x256xf32>
      tpu.vector_store %arg4[%c0_10, %c0_11], %26 {strides = array<i32>} : memref<8x256xf32, #tpu.memory_space<vmem>>, vector<8x256xf32>,
    } else {
    }
    %c1_i32_4 = arith.constant 1 : i32
    %9 = arith.cmpi eq, %arg1, %c1_i32_4 : i32
    %10 = arith.extui %9 : i1 to i32
    %c0_i32_5 = arith.constant 0 : i32
    %11 = arith.cmpi ne, %10, %c0_i32_5 : i32
    scf.if %11 {
      %c0 = arith.constant 0 : index
      %c0_6 = arith.constant 0 : index
      %12 = vector.load %arg4[%c0, %c0_6] : memref<8x256xf32, #tpu.memory_space<vmem>>, vector<8x256xf32>
      %cst = arith.constant dense<0.000000e+00> : vector<256xf32>
      %13 = vector.multi_reduction <add>, %12, %cst [0] : vector<8x256xf32> to vector<256xf32>
      %14 = vector.shape_cast %13 : vector<256xf32> to vector<1x256xf32>
      %cst_7 = arith.constant 9.70873807E-4 : f32
      %15 = vector.broadcast %cst_7 : f32 to vector<1x256xf32>
      %16 = arith.mulf %14, %15 : vector<1x256xf32>
      %c0_8 = arith.constant 0 : index
      %c0_9 = arith.constant 0 : index
      %17 = vector.load %arg3[%c0_8, %c0_9] : memref<1x256xf32, #tpu.memory_space<vmem>>, vector<1x256xf32>
      tpu.vector_store %arg3[%c0_8, %c0_9], %16 {strides = array<i32>} : memref<1x256xf32, #tpu.memory_space<vmem>>, vector<1x256xf32>,
    } else {
    }
    return
  }
  func.func @transform_0(%arg0: i32, %arg1: i32) -> (i32, i32) {
    %c0_i32 = arith.constant 0 : i32
    return %arg1, %arg0 : i32, i32
  }
  func.func @transform_1(%arg0: i32, %arg1: i32) -> (i32, i32) {
    %c0_i32 = arith.constant 0 : i32
    %c0_i32_0 = arith.constant 0 : i32
    return %c0_i32, %arg0 : i32, i32
  }
}

</mosaic_0001>

<llo_original>
// kernel: tpu_custom_call.1
$region0: #{tpu_custom_call.1}
  #allocation0 [shape = 'u32[]', space=smem, size = 0x4, offset = 0x4, fixed_abs, tag = 'smem constant byte address 0x4 - core index']
  #allocation1 [shape = 'u32[72,128]{1,0:T(1,128)}', space=vmem, size = 0x9000, scoped, tag = 'internal scratch']
  #allocation2 [shape = 'f32[8,256]{1,0:T(8,128)}', space=vmem, size = 0x2000, scoped, tag = 'scratch operand']
  %s0 = inlined_call_operand.hbm [shape: f32[1030,256], index: 0, kind: input, shape index: {}]
  %s1 = inlined_call_operand.hbm [shape: f32[1,256], index: 1, kind: output, shape index: {}]
  %s2 = sld [smem:[#allocation0]]
  $region53: #{tpu_custom_call.1} parent=0
    _
  %s4 = ssub.s32 1, %s2
  %s5 = scalar_select 0, %s4, %s2
  $region1: #{tpu_custom_call.1} parent=0
    #allocation3 [shape = 'u8[2097152]{0}', space=vmem, size = 0x200000, scoped, tag = 'input window, operand 0']
    #allocation4 [shape = 's32[2]{0}', space=sflag, size = 0x8, scoped, tag = 'scoped memory for tpu_custom_call.1']
    #allocation5 [shape = 's32[2]{0}', space=sflag, size = 0x8, scoped, tag = 'scoped memory for tpu_custom_call.1']
    #allocation6 [shape = 'u8[1024]{0}', space=vmem, size = 0x400, scoped, tag = 'output window, operand 0, single buffered']
    %6 = vsyncpa [#allocation4], 0
    %s7 = scalar_lea.sflag [#allocation4], 1
    %8 = vsyncpa %s7, 0
    %9 = vsyncpa [#allocation5], 0
    loop: start=0, step=1, limit=4
    $region2: #{tpu_custom_call.1} parent=1 // loop_pre_header
      _
    $region3: #{tpu_custom_call.1} parent=1 // loop_header
      %s11 = sphi 0, %s15
      %p12 = scmp.ge.s32.totalorder %s11, 4
      %s18 = sphi 0, %s30
      %s19 = sphi 0, %s26
      %s20 = sphi 0, %s18
      %s21 = sphi 0, %s19
      %s22 = sphi 0, %s20
      %s23 = sphi 0, %s21
      %s35 = sphi 0, %s37
      %s38 = sphi 0, %s35
      %s39 = sphi 0, %s38
      %s55 = sphi 0, %s39
      %s61 = sphi 0, %s63
      %s64 = sphi 0, %s61
      %s65 = sphi 0, %s64
      %s81 = sphi 0, %s65
    $region4: #{tpu_custom_call.1} parent=1 // loop_header_branch
      %14 = sbr.rel (%p12) target = $region8
    $region5: #{tpu_custom_call.1} parent=1 // loop_body
      %s16 = ssub.s32 %s11, 1
      %s17 = ssub.s32 %s11, 2
      %s24 = sadd.s32 1, %s19
      %p25 = scmp.ge.s32.totalorder %s24, 2
      %s26 = scalar_select %p25, 0, %s24
      %s27 = sadd.s32 1, %s18
      %s28 = scalar_select %p25, %s27, %s18
      %p29 = scmp.ge.s32.totalorder %s28, 1
      %s30 = scalar_select %p29, 0, %s28
      %s31 = ssub.s32 %s19, %s26
      %s32 = ssub.s32 %s18, %s30
      %s33 = sor.u32 %s31, %s32
      %p34 = scmp.eq.s32.totalorder %s33, 0
      %s36 = sadd.s32 %s35, 1
      %s37 = scalar_select %p34, %s35, %s36
      %p40 = pneg %p34
      %p41 = scmp.eq.s32.totalorder %s11, 1
      %p42 = por %p40, %p41
      %p43 = scmp.ne.s32.totalorder %s35, %s38
      %p44 = scmp.eq.s32.totalorder %s11, 0
      %p45 = por %p43, %p44
      %p46 = scmp.ne.s32.totalorder %s35, %s38
      %p47 = scmp.eq.s32.totalorder %s16, 1
      %p48 = por %p46, %p47
      %p49 = scmp.ne.s32.totalorder %s38, %s39
      %p50 = scmp.eq.s32.totalorder %s16, 0
      %p51 = por %p49, %p50
      %p52 = scmp.ne.s32.totalorder %s38, %s39
      %p53 = scmp.eq.s32.totalorder %s17, 1
      %p54 = por %p52, %p53
      %p56 = scmp.ne.s32.totalorder %s39, %s55
      %p57 = scmp.eq.s32.totalorder %s17, 0
      %p58 = por %p56, %p57
      %s59 = ssub.s32 %s18, %s30
      %p60 = scmp.eq.s32.totalorder %s59, 0
      %s62 = sadd.s32 %s61, 1
      %s63 = scalar_select %p60, %s61, %s62
      %p66 = pneg %p60
      %p67 = scmp.eq.s32.totalorder %s11, 1
      %p68 = por %p66, %p67
      %p69 = scmp.ne.s32.totalorder %s61, %s64
      %p70 = scmp.eq.s32.totalorder %s11, 0
      %p71 = por %p69, %p70
      %p72 = scmp.ne.s32.totalorder %s61, %s64
      %p73 = scmp.eq.s32.totalorder %s16, 1
      %p74 = por %p72, %p73
      %p75 = scmp.ne.s32.totalorder %s64, %s65
      %p76 = scmp.eq.s32.totalorder %s16, 0
      %p77 = por %p75, %p76
      %p78 = scmp.ne.s32.totalorder %s64, %s65
      %p79 = scmp.eq.s32.totalorder %s17, 1
      %p80 = por %p78, %p79
      %p82 = scmp.ne.s32.totalorder %s65, %s81
      %p83 = scmp.eq.s32.totalorder %s17, 0
      %p84 = por %p82, %p83
      %p85 = scmp.le.s32.totalorder 1, %s11
      %p86 = scmp.lt.s32.totalorder %s11, 3
      %p87 = pnand %p85, %p86
      %p88 = pneg %p87
      // Predicated region
      $region9: #{tpu_custom_call.1} parent=5 // pred_check
        _
      $region10: #{tpu_custom_call.1} parent=5 // pred_check_branch
        %90 = sbr.rel (%p87) target = $region12
      $region11: #{tpu_custom_call.1} parent=5 // pred_region
        %s91 = ssub.s32 %s11, 1
      $region12: #{tpu_custom_call.1} parent=5 // pred_fallthru
        _
      %p92 = scmp.lt.s32.totalorder %s11, 2
      // Predicated region
      $region13: #{tpu_custom_call.1} parent=5 // pred_check
        %p93 = pneg %p92
      $region14: #{tpu_custom_call.1} parent=5 // pred_check_branch
        %95 = sbr.rel (%p93) target = $region16
      $region15: #{tpu_custom_call.1} parent=5 // pred_region
        // Predicated region
        $region17: #{tpu_custom_call.1} parent=15 // pred_check
          %p96 = pneg %p45
        $region18: #{tpu_custom_call.1} parent=15 // pred_check_branch
          %98 = sbr.rel (%p96) target = $region20
        $region19: #{tpu_custom_call.1} parent=15 // pred_region
          %s99 = sand.u32 %s35, 1
          %s100 = scalar_lea.sflag [#allocation4], %s99
          %s101 = sand.u32 %s35, 1
          %s102 = smul.addr %s101, 2048
          %s103 = scalar_lea.vmem [#allocation3], %s102
          %s104 = smul.u32 128, %s19
          %s105 = smul.u32 2, %s18
          %s106 = ssub.s32 129, %s104
          %p107 = scmp.lt.s32.totalorder %s106, 128
          %s108 = scalar_select %p107, %s106, 128
          %s109 = smul.u32 8, %s108
          %s110 = smul.u32 %s109, 2
          %s111 = ssub.s32 2048, %s110
          %s112 = sshll.u32 %s111, 4
          %113 = vsyncadd %s100, %s112
          %p114 = scmp.ne.s32.totalorder 0, %s110
          %s115 = smul.addr %s104, 2
          %s116 = sadd.s32 %s105, %s115
          %s117 = smul.addr %s116, 8
          %s118 = scalar_lea.hbm %s0, %s117
          %s119 = smul.u32 16, %s108
          %s120 = sshll.u32 %s118, 4
          %s121 = int_to_ptr.hbm [resolvable:$true] %s120
          %s122 = sshll.u32 %s103, 4
          %s123 = int_to_ptr.vmem [resolvable:$true] %s122
          %s124 = sshll.u32 %s119, 4
          %128 = dma.hbm_to_vmem [thread:$0]  (%p114), %s121, %s124, %s123, %s100, 256, 256, 16
        $region20: #{tpu_custom_call.1} parent=15 // pred_fallthru
          _
      $region16: #{tpu_custom_call.1} parent=5 // pred_fallthru
        _
      %p129 = scmp.le.s32.totalorder 1, %s11
      %p130 = scmp.lt.s32.totalorder %s11, 3
      %p131 = pnand %p129, %p130
      %p132 = pneg %p131
      // Predicated region
      $region21: #{tpu_custom_call.1} parent=5 // pred_check
        _
      $region22: #{tpu_custom_call.1} parent=5 // pred_check_branch
        %134 = sbr.rel (%p131) target = $region24
      $region23: #{tpu_custom_call.1} parent=5 // pred_region
        %s135 = ssub.s32 %s11, 1
        %s136 = sand.u32 %s38, 1
        %s137 = scalar_lea.sflag [#allocation4], %s136
        %s138 = sand.u32 %s38, 1
        %s139 = smul.addr %s138, 2048
        %s140 = scalar_lea.vmem [#allocation3], %s139
        // Predicated region
        $region25: #{tpu_custom_call.1} parent=23 // pred_check
          %p141 = pneg %p51
        $region26: #{tpu_custom_call.1} parent=23 // pred_check_branch
          %143 = sbr.rel (%p141) target = $region28
        $region27: #{tpu_custom_call.1} parent=23 // pred_region
          %145 = dma.done %s137, 32768
        $region28: #{tpu_custom_call.1} parent=23 // pred_fallthru
          _
        %s146 = sand.u32 %s38, 1
        %s147 = scalar_lea.sflag [#allocation4], %s146
        %s148 = sand.u32 %s38, 1
        %s149 = smul.addr %s148, 2048
        %s150 = scalar_lea.vmem [#allocation3], %s149
        %p151 = pneg %p51
        %p152 = pneg %p48
        %p153 = pneg %p77
        %p154 = pneg %p74
        %s155 = smul.u32 128, %s21
        %s156 = smul.u32 2, %s20
        %s157 = ssub.s32 129, %s155
        %p158 = scmp.lt.s32.totalorder %s157, 128
        %s159 = scalar_select %p158, %s157, 128
        %s160 = smul.u32 8, %s159
        %s161 = smul.u32 %s160, 2
        %s162 = smul.u32 2, %s20
        %p163 = scmp.eq.s32.totalorder %s21, 0
        // Predicated region
        $region29: #{tpu_custom_call.1} parent=23 // pred_check
          %p164 = pneg %p163
        $region30: #{tpu_custom_call.1} parent=23 // pred_check_branch
          %166 = sbr.rel (%p164) target = $region32
        $region31: #{tpu_custom_call.1} parent=23 // pred_region
          %167 = vst [vmem:[#allocation2] sm:$0xff] 0.0
          %168 = vst [vmem:[#allocation2 + $0x8] sm:$0xff] 0.0
        $region32: #{tpu_custom_call.1} parent=23 // pred_fallthru
          _
        %p169 = scmp.ne.s32.totalorder %s21, 1
        // Predicated region
        $region33: #{tpu_custom_call.1} parent=23 // pred_check
          %p170 = pneg %p169
        $region34: #{tpu_custom_call.1} parent=23 // pred_check_branch
          %172 = sbr.rel (%p170) target = $region36
        $region35: #{tpu_custom_call.1} parent=23 // pred_region
          %v173 = vld [vmem:[#allocation2] sm:$0xff]
          %v174 = vld [vmem:[#allocation2 + $0x8] sm:$0xff]
          %v175 = vld [vmem:[%s140] sm:$0xff]
          %v176 = vld [vmem:[%s140 + $0x8] sm:$0xff]
          %v177 = vld [vmem:[%s140 + $0x10] sm:$0xff]
          %v178 = vld [vmem:[%s140 + $0x18] sm:$0xff]
          %v179 = vld [vmem:[%s140 + $0x20] sm:$0xff]
          %v180 = vld [vmem:[%s140 + $0x28] sm:$0xff]
          %v181 = vld [vmem:[%s140 + $0x30] sm:$0xff]
          %v182 = vld [vmem:[%s140 + $0x38] sm:$0xff]
          %v183 = vld [vmem:[%s140 + $0x40] sm:$0xff]
          %v184 = vld [vmem:[%s140 + $0x48] sm:$0xff]
          %v185 = vld [vmem:[%s140 + $0x50] sm:$0xff]
          %v186 = vld [vmem:[%s140 + $0x58] sm:$0xff]
          %v187 = vld [vmem:[%s140 + $0x60] sm:$0xff]
          %v188 = vld [vmem:[%s140 + $0x68] sm:$0xff]
          %v189 = vld [vmem:[%s140 + $0x70] sm:$0xff]
          %v190 = vld [vmem:[%s140 + $0x78] sm:$0xff]
          %v191 = vld [vmem:[%s140 + $0x80] sm:$0xff]
          %v192 = vld [vmem:[%s140 + $0x88] sm:$0xff]
          %v193 = vld [vmem:[%s140 + $0x90] sm:$0xff]
          %v194 = vld [vmem:[%s140 + $0x98] sm:$0xff]
          %v195 = vld [vmem:[%s140 + $0xa0] sm:$0xff]
          %v196 = vld [vmem:[%s140 + $0xa8] sm:$0xff]
          %v197 = vld [vmem:[%s140 + $0xb0] sm:$0xff]
          %v198 = vld [vmem:[%s140 + $0xb8] sm:$0xff]
          %v199 = vld [vmem:[%s140 + $0xc0] sm:$0xff]
          %v200 = vld [vmem:[%s140 + $0xc8] sm:$0xff]
          %v201 = vld [vmem:[%s140 + $0xd0] sm:$0xff]
          %v202 = vld [vmem:[%s140 + $0xd8] sm:$0xff]
          %v203 = vld [vmem:[%s140 + $0xe0] sm:$0xff]
          %v204 = vld [vmem:[%s140 + $0xe8] sm:$0xff]
          %v205 = vld [vmem:[%s140 + $0xf0] sm:$0xff]
          %v206 = vld [vmem:[%s140 + $0xf8] sm:$0xff]
          %v207 = vld [vmem:[%s140 + $0x100] sm:$0xff]
          %v208 = vld [vmem:[%s140 + $0x108] sm:$0xff]
          %v209 = vld [vmem:[%s140 + $0x110] sm:$0xff]
          %v210 = vld [vmem:[%s140 + $0x118] sm:$0xff]
          %v211 = vld [vmem:[%s140 + $0x120] sm:$0xff]
          %v212 = vld [vmem:[%s140 + $0x128] sm:$0xff]
          %v213 = vld [vmem:[%s140 + $0x130] sm:$0xff]
          %v214 = vld [vmem:[%s140 + $0x138] sm:$0xff]
          %v215 = vld [vmem:[%s140 + $0x140] sm:$0xff]
          %v216 = vld [vmem:[%s140 + $0x148] sm:$0xff]
          %v217 = vld [vmem:[%s140 + $0x150] sm:$0xff]
          %v218 = vld [vmem:[%s140 + $0x158] sm:$0xff]
          %v219 = vld [vmem:[%s140 + $0x160] sm:$0xff]
          %v220 = vld [vmem:[%s140 + $0x168] sm:$0xff]
          %v221 = vld [vmem:[%s140 + $0x170] sm:$0xff]
          %v222 = vld [vmem:[%s140 + $0x178] sm:$0xff]
          %v223 = vld [vmem:[%s140 + $0x180] sm:$0xff]
          %v224 = vld [vmem:[%s140 + $0x188] sm:$0xff]
          %v225 = vld [vmem:[%s140 + $0x190] sm:$0xff]
          %v226 = vld [vmem:[%s140 + $0x198] sm:$0xff]
          %v227 = vld [vmem:[%s140 + $0x1a0] sm:$0xff]
          %v228 = vld [vmem:[%s140 + $0x1a8] sm:$0xff]
          %v229 = vld [vmem:[%s140 + $0x1b0] sm:$0xff]
          %v230 = vld [vmem:[%s140 + $0x1b8] sm:$0xff]
          %v231 = vld [vmem:[%s140 + $0x1c0] sm:$0xff]
          %v232 = vld [vmem:[%s140 + $0x1c8] sm:$0xff]
          %v233 = vld [vmem:[%s140 + $0x1d0] sm:$0xff]
          %v234 = vld [vmem:[%s140 + $0x1d8] sm:$0xff]
          %v235 = vld [vmem:[%s140 + $0x1e0] sm:$0xff]
          %v236 = vld [vmem:[%s140 + $0x1e8] sm:$0xff]
          %v237 = vld [vmem:[%s140 + $0x1f0] sm:$0xff]
          %v238 = vld [vmem:[%s140 + $0x1f8] sm:$0xff]
          %v239 = vld [vmem:[%s140 + $0x200] sm:$0xff]
          %v240 = vld [vmem:[%s140 + $0x208] sm:$0xff]
          %v241 = vld [vmem:[%s140 + $0x210] sm:$0xff]
          %v242 = vld [vmem:[%s140 + $0x218] sm:$0xff]
          %v243 = vld [vmem:[%s140 + $0x220] sm:$0xff]
          %v244 = vld [vmem:[%s140 + $0x228] sm:$0xff]
          %v245 = vld [vmem:[%s140 + $0x230] sm:$0xff]
          %v246 = vld [vmem:[%s140 + $0x238] sm:$0xff]
          %v247 = vld [vmem:[%s140 + $0x240] sm:$0xff]
          %v248 = vld [vmem:[%s140 + $0x248] sm:$0xff]
          %v249 = vld [vmem:[%s140 + $0x250] sm:$0xff]
          %v250 = vld [vmem:[%s140 + $0x258] sm:$0xff]
          %v251 = vld [vmem:[%s140 + $0x260] sm:$0xff]
          %v252 = vld [vmem:[%s140 + $0x268] sm:$0xff]
          %v253 = vld [vmem:[%s140 + $0x270] sm:$0xff]
          %v254 = vld [vmem:[%s140 + $0x278] sm:$0xff]
          %v255 = vld [vmem:[%s140 + $0x280] sm:$0xff]
          %v256 = vld [vmem:[%s140 + $0x288] sm:$0xff]
          %v257 = vld [vmem:[%s140 + $0x290] sm:$0xff]
          %v258 = vld [vmem:[%s140 + $0x298] sm:$0xff]
          %v259 = vld [vmem:[%s140 + $0x2a0] sm:$0xff]
          %v260 = vld [vmem:[%s140 + $0x2a8] sm:$0xff]
          %v261 = vld [vmem:[%s140 + $0x2b0] sm:$0xff]
          %v262 = vld [vmem:[%s140 + $0x2b8] sm:$0xff]
          %v263 = vld [vmem:[%s140 + $0x2c0] sm:$0xff]
          %v264 = vld [vmem:[%s140 + $0x2c8] sm:$0xff]
          %v265 = vld [vmem:[%s140 + $0x2d0] sm:$0xff]
          %v266 = vld [vmem:[%s140 + $0x2d8] sm:$0xff]
          %v267 = vld [vmem:[%s140 + $0x2e0] sm:$0xff]
          %v268 = vld [vmem:[%s140 + $0x2e8] sm:$0xff]
          %v269 = vld [vmem:[%s140 + $0x2f0] sm:$0xff]
          %v270 = vld [vmem:[%s140 + $0x2f8] sm:$0xff]
          %v271 = vld [vmem:[%s140 + $0x300] sm:$0xff]
          %v272 = vld [vmem:[%s140 + $0x308] sm:$0xff]
          %v273 = vld [vmem:[%s140 + $0x310] sm:$0xff]
          %v274 = vld [vmem:[%s140 + $0x318] sm:$0xff]
          %v275 = vld [vmem:[%s140 + $0x320] sm:$0xff]
          %v276 = vld [vmem:[%s140 + $0x328] sm:$0xff]
          %v277 = vld [vmem:[%s140 + $0x330] sm:$0xff]
          %v278 = vld [vmem:[%s140 + $0x338] sm:$0xff]
          %v279 = vld [vmem:[%s140 + $0x340] sm:$0xff]
          %v280 = vld [vmem:[%s140 + $0x348] sm:$0xff]
          %v281 = vld [vmem:[%s140 + $0x350] sm:$0xff]
          %v282 = vld [vmem:[%s140 + $0x358] sm:$0xff]
          %v283 = vld [vmem:[%s140 + $0x360] sm:$0xff]
          %v284 = vld [vmem:[%s140 + $0x368] sm:$0xff]
          %v285 = vld [vmem:[%s140 + $0x370] sm:$0xff]
          %v286 = vld [vmem:[%s140 + $0x378] sm:$0xff]
          %v287 = vld [vmem:[%s140 + $0x380] sm:$0xff]
          %v288 = vld [vmem:[%s140 + $0x388] sm:$0xff]
          %v289 = vld [vmem:[%s140 + $0x390] sm:$0xff]
          %v290 = vld [vmem:[%s140 + $0x398] sm:$0xff]
          %v291 = vld [vmem:[%s140 + $0x3a0] sm:$0xff]
          %v292 = vld [vmem:[%s140 + $0x3a8] sm:$0xff]
          %v293 = vld [vmem:[%s140 + $0x3b0] sm:$0xff]
          %v294 = vld [vmem:[%s140 + $0x3b8] sm:$0xff]
          %v295 = vld [vmem:[%s140 + $0x3c0] sm:$0xff]
          %v296 = vld [vmem:[%s140 + $0x3c8] sm:$0xff]
          %v297 = vld [vmem:[%s140 + $0x3d0] sm:$0xff]
          %v298 = vld [vmem:[%s140 + $0x3d8] sm:$0xff]
          %v299 = vld [vmem:[%s140 + $0x3e0] sm:$0xff]
          %v300 = vld [vmem:[%s140 + $0x3e8] sm:$0xff]
          %v301 = vld [vmem:[%s140 + $0x3f0] sm:$0xff]
          %v302 = vld [vmem:[%s140 + $0x3f8] sm:$0xff]
          %v303 = vld [vmem:[%s140 + $0x400] sm:$0xff]
          %v304 = vld [vmem:[%s140 + $0x408] sm:$0xff]
          %v305 = vld [vmem:[%s140 + $0x410] sm:$0xff]
          %v306 = vld [vmem:[%s140 + $0x418] sm:$0xff]
          %v307 = vld [vmem:[%s140 + $0x420] sm:$0xff]
          %v308 = vld [vmem:[%s140 + $0x428] sm:$0xff]
          %v309 = vld [vmem:[%s140 + $0x430] sm:$0xff]
          %v310 = vld [vmem:[%s140 + $0x438] sm:$0xff]
          %v311 = vld [vmem:[%s140 + $0x440] sm:$0xff]
          %v312 = vld [vmem:[%s140 + $0x448] sm:$0xff]
          %v313 = vld [vmem:[%s140 + $0x450] sm:$0xff]
          %v314 = vld [vmem:[%s140 + $0x458] sm:$0xff]
          %v315 = vld [vmem:[%s140 + $0x460] sm:$0xff]
          %v316 = vld [vmem:[%s140 + $0x468] sm:$0xff]
          %v317 = vld [vmem:[%s140 + $0x470] sm:$0xff]
          %v318 = vld [vmem:[%s140 + $0x478] sm:$0xff]
          %v319 = vld [vmem:[%s140 + $0x480] sm:$0xff]
          %v320 = vld [vmem:[%s140 + $0x488] sm:$0xff]
          %v321 = vld [vmem:[%s140 + $0x490] sm:$0xff]
          %v322 = vld [vmem:[%s140 + $0x498] sm:$0xff]
          %v323 = vld [vmem:[%s140 + $0x4a0] sm:$0xff]
          %v324 = vld [vmem:[%s140 + $0x4a8] sm:$0xff]
          %v325 = vld [vmem:[%s140 + $0x4b0] sm:$0xff]
          %v326 = vld [vmem:[%s140 + $0x4b8] sm:$0xff]
          %v327 = vld [vmem:[%s140 + $0x4c0] sm:$0xff]
          %v328 = vld [vmem:[%s140 + $0x4c8] sm:$0xff]
          %v329 = vld [vmem:[%s140 + $0x4d0] sm:$0xff]
          %v330 = vld [vmem:[%s140 + $0x4d8] sm:$0xff]
          %v331 = vld [vmem:[%s140 + $0x4e0] sm:$0xff]
          %v332 = vld [vmem:[%s140 + $0x4e8] sm:$0xff]
          %v333 = vld [vmem:[%s140 + $0x4f0] sm:$0xff]
          %v334 = vld [vmem:[%s140 + $0x4f8] sm:$0xff]
          %v335 = vld [vmem:[%s140 + $0x500] sm:$0xff]
          %v336 = vld [vmem:[%s140 + $0x508] sm:$0xff]
          %v337 = vld [vmem:[%s140 + $0x510] sm:$0xff]
          %v338 = vld [vmem:[%s140 + $0x518] sm:$0xff]
          %v339 = vld [vmem:[%s140 + $0x520] sm:$0xff]
          %v340 = vld [vmem:[%s140 + $0x528] sm:$0xff]
          %v341 = vld [vmem:[%s140 + $0x530] sm:$0xff]
          %v342 = vld [vmem:[%s140 + $0x538] sm:$0xff]
          %v343 = vld [vmem:[%s140 + $0x540] sm:$0xff]
          %v344 = vld [vmem:[%s140 + $0x548] sm:$0xff]
          %v345 = vld [vmem:[%s140 + $0x550] sm:$0xff]
          %v346 = vld [vmem:[%s140 + $0x558] sm:$0xff]
          %v347 = vld [vmem:[%s140 + $0x560] sm:$0xff]
          %v348 = vld [vmem:[%s140 + $0x568] sm:$0xff]
          %v349 = vld [vmem:[%s140 + $0x570] sm:$0xff]
          %v350 = vld [vmem:[%s140 + $0x578] sm:$0xff]
          %v351 = vld [vmem:[%s140 + $0x580] sm:$0xff]
          %v352 = vld [vmem:[%s140 + $0x588] sm:$0xff]
          %v353 = vld [vmem:[%s140 + $0x590] sm:$0xff]
          %v354 = vld [vmem:[%s140 + $0x598] sm:$0xff]
          %v355 = vld [vmem:[%s140 + $0x5a0] sm:$0xff]
          %v356 = vld [vmem:[%s140 + $0x5a8] sm:$0xff]
          %v357 = vld [vmem:[%s140 + $0x5b0] sm:$0xff]
          %v358 = vld [vmem:[%s140 + $0x5b8] sm:$0xff]
          %v359 = vld [vmem:[%s140 + $0x5c0] sm:$0xff]
          %v360 = vld [vmem:[%s140 + $0x5c8] sm:$0xff]
          %v361 = vld [vmem:[%s140 + $0x5d0] sm:$0xff]
          %v362 = vld [vmem:[%s140 + $0x5d8] sm:$0xff]
          %v363 = vld [vmem:[%s140 + $0x5e0] sm:$0xff]
          %v364 = vld [vmem:[%s140 + $0x5e8] sm:$0xff]
          %v365 = vld [vmem:[%s140 + $0x5f0] sm:$0xff]
          %v366 = vld [vmem:[%s140 + $0x5f8] sm:$0xff]
          %v367 = vld [vmem:[%s140 + $0x600] sm:$0xff]
          %v368 = vld [vmem:[%s140 + $0x608] sm:$0xff]
          %v369 = vld [vmem:[%s140 + $0x610] sm:$0xff]
          %v370 = vld [vmem:[%s140 + $0x618] sm:$0xff]
          %v371 = vld [vmem:[%s140 + $0x620] sm:$0xff]
          %v372 = vld [vmem:[%s140 + $0x628] sm:$0xff]
          %v373 = vld [vmem:[%s140 + $0x630] sm:$0xff]
          %v374 = vld [vmem:[%s140 + $0x638] sm:$0xff]
          %v375 = vld [vmem:[%s140 + $0x640] sm:$0xff]
          %v376 = vld [vmem:[%s140 + $0x648] sm:$0xff]
          %v377 = vld [vmem:[%s140 + $0x650] sm:$0xff]
          %v378 = vld [vmem:[%s140 + $0x658] sm:$0xff]
          %v379 = vld [vmem:[%s140 + $0x660] sm:$0xff]
          %v380 = vld [vmem:[%s140 + $0x668] sm:$0xff]
          %v381 = vld [vmem:[%s140 + $0x670] sm:$0xff]
          %v382 = vld [vmem:[%s140 + $0x678] sm:$0xff]
          %v383 = vld [vmem:[%s140 + $0x680] sm:$0xff]
          %v384 = vld [vmem:[%s140 + $0x688] sm:$0xff]
          %v385 = vld [vmem:[%s140 + $0x690] sm:$0xff]
          %v386 = vld [vmem:[%s140 + $0x698] sm:$0xff]
          %v387 = vld [vmem:[%s140 + $0x6a0] sm:$0xff]
          %v388 = vld [vmem:[%s140 + $0x6a8] sm:$0xff]
          %v389 = vld [vmem:[%s140 + $0x6b0] sm:$0xff]
          %v390 = vld [vmem:[%s140 + $0x6b8] sm:$0xff]
          %v391 = vld [vmem:[%s140 + $0x6c0] sm:$0xff]
          %v392 = vld [vmem:[%s140 + $0x6c8] sm:$0xff]
          %v393 = vld [vmem:[%s140 + $0x6d0] sm:$0xff]
          %v394 = vld [vmem:[%s140 + $0x6d8] sm:$0xff]
          %v395 = vld [vmem:[%s140 + $0x6e0] sm:$0xff]
          %v396 = vld [vmem:[%s140 + $0x6e8] sm:$0xff]
          %v397 = vld [vmem:[%s140 + $0x6f0] sm:$0xff]
          %v398 = vld [vmem:[%s140 + $0x6f8] sm:$0xff]
          %v399 = vld [vmem:[%s140 + $0x700] sm:$0xff]
          %v400 = vld [vmem:[%s140 + $0x708] sm:$0xff]
          %v401 = vld [vmem:[%s140 + $0x710] sm:$0xff]
          %v402 = vld [vmem:[%s140 + $0x718] sm:$0xff]
          %v403 = vld [vmem:[%s140 + $0x720] sm:$0xff]
          %v404 = vld [vmem:[%s140 + $0x728] sm:$0xff]
          %v405 = vld [vmem:[%s140 + $0x730] sm:$0xff]
          %v406 = vld [vmem:[%s140 + $0x738] sm:$0xff]
          %v407 = vld [vmem:[%s140 + $0x740] sm:$0xff]
          %v408 = vld [vmem:[%s140 + $0x748] sm:$0xff]
          %v409 = vld [vmem:[%s140 + $0x750] sm:$0xff]
          %v410 = vld [vmem:[%s140 + $0x758] sm:$0xff]
          %v411 = vld [vmem:[%s140 + $0x760] sm:$0xff]
          %v412 = vld [vmem:[%s140 + $0x768] sm:$0xff]
          %v413 = vld [vmem:[%s140 + $0x770] sm:$0xff]
          %v414 = vld [vmem:[%s140 + $0x778] sm:$0xff]
          %v415 = vld [vmem:[%s140 + $0x780] sm:$0xff]
          %v416 = vld [vmem:[%s140 + $0x788] sm:$0xff]
          %v417 = vld [vmem:[%s140 + $0x790] sm:$0xff]
          %v418 = vld [vmem:[%s140 + $0x798] sm:$0xff]
          %v419 = vld [vmem:[%s140 + $0x7a0] sm:$0xff]
          %v420 = vld [vmem:[%s140 + $0x7a8] sm:$0xff]
          %v421 = vld [vmem:[%s140 + $0x7b0] sm:$0xff]
          %v422 = vld [vmem:[%s140 + $0x7b8] sm:$0xff]
          %v423 = vld [vmem:[%s140 + $0x7c0] sm:$0xff]
          %v424 = vld [vmem:[%s140 + $0x7c8] sm:$0xff]
          %v425 = vld [vmem:[%s140 + $0x7d0] sm:$0xff]
          %v426 = vld [vmem:[%s140 + $0x7d8] sm:$0xff]
          %v427 = vld [vmem:[%s140 + $0x7e0] sm:$0xff]
          %v428 = vld [vmem:[%s140 + $0x7e8] sm:$0xff]
          %v429 = vld [vmem:[%s140 + $0x7f0] sm:$0xff]
          %v430 = vld [vmem:[%s140 + $0x7f8] sm:$0xff]
          %v431 = vadd.f32 %v175, %v177
          %v432 = vadd.f32 %v431, %v179
          %v433 = vadd.f32 %v432, %v181
          %v434 = vadd.f32 %v433, %v183
          %v435 = vadd.f32 %v434, %v185
          %v436 = vadd.f32 %v435, %v187
          %v437 = vadd.f32 %v436, %v189
          %v438 = vadd.f32 %v437, %v191
          %v439 = vadd.f32 %v438, %v193
          %v440 = vadd.f32 %v439, %v195
          %v441 = vadd.f32 %v440, %v197
          %v442 = vadd.f32 %v441, %v199
          %v443 = vadd.f32 %v442, %v201
          %v444 = vadd.f32 %v443, %v203
          %v445 = vadd.f32 %v444, %v205
          %v446 = vadd.f32 %v445, %v207
          %v447 = vadd.f32 %v446, %v209
          %v448 = vadd.f32 %v447, %v211
          %v449 = vadd.f32 %v448, %v213
          %v450 = vadd.f32 %v449, %v215
          %v451 = vadd.f32 %v450, %v217
          %v452 = vadd.f32 %v451, %v219
          %v453 = vadd.f32 %v452, %v221
          %v454 = vadd.f32 %v453, %v223
          %v455 = vadd.f32 %v454, %v225
          %v456 = vadd.f32 %v455, %v227
          %v457 = vadd.f32 %v456, %v229
          %v458 = vadd.f32 %v457, %v231
          %v459 = vadd.f32 %v458, %v233
          %v460 = vadd.f32 %v459, %v235
          %v461 = vadd.f32 %v460, %v237
          %v462 = vadd.f32 %v461, %v239
          %v463 = vadd.f32 %v462, %v241
          %v464 = vadd.f32 %v463, %v243
          %v465 = vadd.f32 %v464, %v245
          %v466 = vadd.f32 %v465, %v247
          %v467 = vadd.f32 %v466, %v249
          %v468 = vadd.f32 %v467, %v251
          %v469 = vadd.f32 %v468, %v253
          %v470 = vadd.f32 %v469, %v255
          %v471 = vadd.f32 %v470, %v257
          %v472 = vadd.f32 %v471, %v259
          %v473 = vadd.f32 %v472, %v261
          %v474 = vadd.f32 %v473, %v263
          %v475 = vadd.f32 %v474, %v265
          %v476 = vadd.f32 %v475, %v267
          %v477 = vadd.f32 %v476, %v269
          %v478 = vadd.f32 %v477, %v271
          %v479 = vadd.f32 %v478, %v273
          %v480 = vadd.f32 %v479, %v275
          %v481 = vadd.f32 %v480, %v277
          %v482 = vadd.f32 %v481, %v279
          %v483 = vadd.f32 %v482, %v281
          %v484 = vadd.f32 %v483, %v283
          %v485 = vadd.f32 %v484, %v285
          %v486 = vadd.f32 %v485, %v287
          %v487 = vadd.f32 %v486, %v289
          %v488 = vadd.f32 %v487, %v291
          %v489 = vadd.f32 %v488, %v293
          %v490 = vadd.f32 %v489, %v295
          %v491 = vadd.f32 %v490, %v297
          %v492 = vadd.f32 %v491, %v299
          %v493 = vadd.f32 %v492, %v301
          %v494 = vadd.f32 %v493, %v303
          %v495 = vadd.f32 %v494, %v305
          %v496 = vadd.f32 %v495, %v307
          %v497 = vadd.f32 %v496, %v309
          %v498 = vadd.f32 %v497, %v311
          %v499 = vadd.f32 %v498, %v313
          %v500 = vadd.f32 %v499, %v315
          %v501 = vadd.f32 %v500, %v317
          %v502 = vadd.f32 %v501, %v319
          %v503 = vadd.f32 %v502, %v321
          %v504 = vadd.f32 %v503, %v323
          %v505 = vadd.f32 %v504, %v325
          %v506 = vadd.f32 %v505, %v327
          %v507 = vadd.f32 %v506, %v329
          %v508 = vadd.f32 %v507, %v331
          %v509 = vadd.f32 %v508, %v333
          %v510 = vadd.f32 %v509, %v335
          %v511 = vadd.f32 %v510, %v337
          %v512 = vadd.f32 %v511, %v339
          %v513 = vadd.f32 %v512, %v341
          %v514 = vadd.f32 %v513, %v343
          %v515 = vadd.f32 %v514, %v345
          %v516 = vadd.f32 %v515, %v347
          %v517 = vadd.f32 %v516, %v349
          %v518 = vadd.f32 %v517, %v351
          %v519 = vadd.f32 %v518, %v353
          %v520 = vadd.f32 %v519, %v355
          %v521 = vadd.f32 %v520, %v357
          %v522 = vadd.f32 %v521, %v359
          %v523 = vadd.f32 %v522, %v361
          %v524 = vadd.f32 %v523, %v363
          %v525 = vadd.f32 %v524, %v365
          %v526 = vadd.f32 %v525, %v367
          %v527 = vadd.f32 %v526, %v369
          %v528 = vadd.f32 %v527, %v371
          %v529 = vadd.f32 %v528, %v373
          %v530 = vadd.f32 %v529, %v375
          %v531 = vadd.f32 %v530, %v377
          %v532 = vadd.f32 %v531, %v379
          %v533 = vadd.f32 %v532, %v381
          %v534 = vadd.f32 %v533, %v383
          %v535 = vadd.f32 %v534, %v385
          %v536 = vadd.f32 %v535, %v387
          %v537 = vadd.f32 %v536, %v389
          %v538 = vadd.f32 %v537, %v391
          %v539 = vadd.f32 %v538, %v393
          %v540 = vadd.f32 %v539, %v395
          %v541 = vadd.f32 %v540, %v397
          %v542 = vadd.f32 %v541, %v399
          %v543 = vadd.f32 %v542, %v401
          %v544 = vadd.f32 %v543, %v403
          %v545 = vadd.f32 %v544, %v405
          %v546 = vadd.f32 %v545, %v407
          %v547 = vadd.f32 %v546, %v409
          %v548 = vadd.f32 %v547, %v411
          %v549 = vadd.f32 %v548, %v413
          %v550 = vadd.f32 %v549, %v415
          %v551 = vadd.f32 %v550, %v417
          %v552 = vadd.f32 %v551, %v419
          %v553 = vadd.f32 %v552, %v421
          %v554 = vadd.f32 %v553, %v423
          %v555 = vadd.f32 %v554, %v425
          %v556 = vadd.f32 %v555, %v427
          %v557 = vadd.f32 %v556, %v429
          %v558 = vadd.f32 %v176, %v178
          %v559 = vadd.f32 %v558, %v180
          %v560 = vadd.f32 %v559, %v182
          %v561 = vadd.f32 %v560, %v184
          %v562 = vadd.f32 %v561, %v186
          %v563 = vadd.f32 %v562, %v188
          %v564 = vadd.f32 %v563, %v190
          %v565 = vadd.f32 %v564, %v192
          %v566 = vadd.f32 %v565, %v194
          %v567 = vadd.f32 %v566, %v196
          %v568 = vadd.f32 %v567, %v198
          %v569 = vadd.f32 %v568, %v200
          %v570 = vadd.f32 %v569, %v202
          %v571 = vadd.f32 %v570, %v204
          %v572 = vadd.f32 %v571, %v206
          %v573 = vadd.f32 %v572, %v208
          %v574 = vadd.f32 %v573, %v210
          %v575 = vadd.f32 %v574, %v212
          %v576 = vadd.f32 %v575, %v214
          %v577 = vadd.f32 %v576, %v216
          %v578 = vadd.f32 %v577, %v218
          %v579 = vadd.f32 %v578, %v220
          %v580 = vadd.f32 %v579, %v222
          %v581 = vadd.f32 %v580, %v224
          %v582 = vadd.f32 %v581, %v226
          %v583 = vadd.f32 %v582, %v228
          %v584 = vadd.f32 %v583, %v230
          %v585 = vadd.f32 %v584, %v232
          %v586 = vadd.f32 %v585, %v234
          %v587 = vadd.f32 %v586, %v236
          %v588 = vadd.f32 %v587, %v238
          %v589 = vadd.f32 %v588, %v240
          %v590 = vadd.f32 %v589, %v242
          %v591 = vadd.f32 %v590, %v244
          %v592 = vadd.f32 %v591, %v246
          %v593 = vadd.f32 %v592, %v248
          %v594 = vadd.f32 %v593, %v250
          %v595 = vadd.f32 %v594, %v252
          %v596 = vadd.f32 %v595, %v254
          %v597 = vadd.f32 %v596, %v256
          %v598 = vadd.f32 %v597, %v258
          %v599 = vadd.f32 %v598, %v260
          %v600 = vadd.f32 %v599, %v262
          %v601 = vadd.f32 %v600, %v264
          %v602 = vadd.f32 %v601, %v266
          %v603 = vadd.f32 %v602, %v268
          %v604 = vadd.f32 %v603, %v270
          %v605 = vadd.f32 %v604, %v272
          %v606 = vadd.f32 %v605, %v274
          %v607 = vadd.f32 %v606, %v276
          %v608 = vadd.f32 %v607, %v278
          %v609 = vadd.f32 %v608, %v280
          %v610 = vadd.f32 %v609, %v282
          %v611 = vadd.f32 %v610, %v284
          %v612 = vadd.f32 %v611, %v286
          %v613 = vadd.f32 %v612, %v288
          %v614 = vadd.f32 %v613, %v290
          %v615 = vadd.f32 %v614, %v292
          %v616 = vadd.f32 %v615, %v294
          %v617 = vadd.f32 %v616, %v296
          %v618 = vadd.f32 %v617, %v298
          %v619 = vadd.f32 %v618, %v300
          %v620 = vadd.f32 %v619, %v302
          %v621 = vadd.f32 %v620, %v304
          %v622 = vadd.f32 %v621, %v306
          %v623 = vadd.f32 %v622, %v308
          %v624 = vadd.f32 %v623, %v310
          %v625 = vadd.f32 %v624, %v312
          %v626 = vadd.f32 %v625, %v314
          %v627 = vadd.f32 %v626, %v316
          %v628 = vadd.f32 %v627, %v318
          %v629 = vadd.f32 %v628, %v320
          %v630 = vadd.f32 %v629, %v322
          %v631 = vadd.f32 %v630, %v324
          %v632 = vadd.f32 %v631, %v326
          %v633 = vadd.f32 %v632, %v328
          %v634 = vadd.f32 %v633, %v330
          %v635 = vadd.f32 %v634, %v332
          %v636 = vadd.f32 %v635, %v334
          %v637 = vadd.f32 %v636, %v336
          %v638 = vadd.f32 %v637, %v338
          %v639 = vadd.f32 %v638, %v340
          %v640 = vadd.f32 %v639, %v342
          %v641 = vadd.f32 %v640, %v344
          %v642 = vadd.f32 %v641, %v346
          %v643 = vadd.f32 %v642, %v348
          %v644 = vadd.f32 %v643, %v350
          %v645 = vadd.f32 %v644, %v352
          %v646 = vadd.f32 %v645, %v354
          %v647 = vadd.f32 %v646, %v356
          %v648 = vadd.f32 %v647, %v358
          %v649 = vadd.f32 %v648, %v360
          %v650 = vadd.f32 %v649, %v362
          %v651 = vadd.f32 %v650, %v364
          %v652 = vadd.f32 %v651, %v366
          %v653 = vadd.f32 %v652, %v368
          %v654 = vadd.f32 %v653, %v370
          %v655 = vadd.f32 %v654, %v372
          %v656 = vadd.f32 %v655, %v374
          %v657 = vadd.f32 %v656, %v376
          %v658 = vadd.f32 %v657, %v378
          %v659 = vadd.f32 %v658, %v380
          %v660 = vadd.f32 %v659, %v382
          %v661 = vadd.f32 %v660, %v384
          %v662 = vadd.f32 %v661, %v386
          %v663 = vadd.f32 %v662, %v388
          %v664 = vadd.f32 %v663, %v390
          %v665 = vadd.f32 %v664, %v392
          %v666 = vadd.f32 %v665, %v394
          %v667 = vadd.f32 %v666, %v396
          %v668 = vadd.f32 %v667, %v398
          %v669 = vadd.f32 %v668, %v400
          %v670 = vadd.f32 %v669, %v402
          %v671 = vadd.f32 %v670, %v404
          %v672 = vadd.f32 %v671, %v406
          %v673 = vadd.f32 %v672, %v408
          %v674 = vadd.f32 %v673, %v410
          %v675 = vadd.f32 %v674, %v412
          %v676 = vadd.f32 %v675, %v414
          %v677 = vadd.f32 %v676, %v416
          %v678 = vadd.f32 %v677, %v418
          %v679 = vadd.f32 %v678, %v420
          %v680 = vadd.f32 %v679, %v422
          %v681 = vadd.f32 %v680, %v424
          %v682 = vadd.f32 %v681, %v426
          %v683 = vadd.f32 %v682, %v428
          %v684 = vadd.f32 %v683, %v430
          %v685 = vadd.f32 %v173, %v557
          %v686 = vadd.f32 %v174, %v684
          %687 = vst [vmem:[#allocation2] sm:$0xff] %v685
          %688 = vst [vmem:[#allocation2 + $0x8] sm:$0xff] %v686
        $region36: #{tpu_custom_call.1} parent=23 // pred_fallthru
          _
        %p689 = scmp.eq.s32.totalorder %s21, 1
        // Predicated region
        $region37: #{tpu_custom_call.1} parent=23 // pred_check
          %p690 = pneg %p689
        $region38: #{tpu_custom_call.1} parent=23 // pred_check_branch
          %692 = sbr.rel (%p690) target = $region40
        $region39: #{tpu_custom_call.1} parent=23 // pred_region
          %v693 = vld [vmem:[%s140] sm:$0xff]
          %v694 = vld [vmem:[%s140 + $0x8] sm:$0xff]
          %v695 = vld [vmem:[%s140 + $0x10] sm:$0xff]
          %v696 = vld [vmem:[%s140 + $0x18] sm:$0xff]
          %v697 = vld [vmem:[%s140 + $0x20] sm:$0xff]
          %v698 = vld [vmem:[%s140 + $0x28] sm:$0xff]
          %v699 = vld [vmem:[%s140 + $0x30] sm:$0xff]
          %v700 = vld [vmem:[%s140 + $0x38] sm:$0xff]
          %v701 = vld [vmem:[%s140 + $0x40] sm:$0xff]
          %v702 = vld [vmem:[%s140 + $0x48] sm:$0xff]
          %v703 = vld [vmem:[%s140 + $0x50] sm:$0xff]
          %v704 = vld [vmem:[%s140 + $0x58] sm:$0xff]
          %v705 = vld [vmem:[%s140 + $0x60] sm:$0xff]
          %v706 = vld [vmem:[%s140 + $0x68] sm:$0xff]
          %v707 = vld [vmem:[%s140 + $0x70] sm:$0xff]
          %v708 = vld [vmem:[%s140 + $0x78] sm:$0xff]
          %v709 = vld [vmem:[%s140 + $0x80] sm:$0xff]
          %v710 = vld [vmem:[%s140 + $0x88] sm:$0xff]
          %v711 = vld [vmem:[%s140 + $0x90] sm:$0xff]
          %v712 = vld [vmem:[%s140 + $0x98] sm:$0xff]
          %v713 = vld [vmem:[%s140 + $0xa0] sm:$0xff]
          %v714 = vld [vmem:[%s140 + $0xa8] sm:$0xff]
          %v715 = vld [vmem:[%s140 + $0xb0] sm:$0xff]
          %v716 = vld [vmem:[%s140 + $0xb8] sm:$0xff]
          %v717 = vld [vmem:[%s140 + $0xc0] sm:$0xff]
          %v718 = vld [vmem:[%s140 + $0xc8] sm:$0xff]
          %v719 = vld [vmem:[%s140 + $0xd0] sm:$0xff]
          %v720 = vld [vmem:[%s140 + $0xd8] sm:$0xff]
          %v721 = vld [vmem:[%s140 + $0xe0] sm:$0xff]
          %v722 = vld [vmem:[%s140 + $0xe8] sm:$0xff]
          %v723 = vld [vmem:[%s140 + $0xf0] sm:$0xff]
          %v724 = vld [vmem:[%s140 + $0xf8] sm:$0xff]
          %v725 = vld [vmem:[%s140 + $0x100] sm:$0xff]
          %v726 = vld [vmem:[%s140 + $0x108] sm:$0xff]
          %v727 = vld [vmem:[%s140 + $0x110] sm:$0xff]
          %v728 = vld [vmem:[%s140 + $0x118] sm:$0xff]
          %v729 = vld [vmem:[%s140 + $0x120] sm:$0xff]
          %v730 = vld [vmem:[%s140 + $0x128] sm:$0xff]
          %v731 = vld [vmem:[%s140 + $0x130] sm:$0xff]
          %v732 = vld [vmem:[%s140 + $0x138] sm:$0xff]
          %v733 = vld [vmem:[%s140 + $0x140] sm:$0xff]
          %v734 = vld [vmem:[%s140 + $0x148] sm:$0xff]
          %v735 = vld [vmem:[%s140 + $0x150] sm:$0xff]
          %v736 = vld [vmem:[%s140 + $0x158] sm:$0xff]
          %v737 = vld [vmem:[%s140 + $0x160] sm:$0xff]
          %v738 = vld [vmem:[%s140 + $0x168] sm:$0xff]
          %v739 = vld [vmem:[%s140 + $0x170] sm:$0xff]
          %v740 = vld [vmem:[%s140 + $0x178] sm:$0xff]
          %v741 = vld [vmem:[%s140 + $0x180] sm:$0xff]
          %v742 = vld [vmem:[%s140 + $0x188] sm:$0xff]
          %v743 = vld [vmem:[%s140 + $0x190] sm:$0xff]
          %v744 = vld [vmem:[%s140 + $0x198] sm:$0xff]
          %v745 = vld [vmem:[%s140 + $0x1a0] sm:$0xff]
          %v746 = vld [vmem:[%s140 + $0x1a8] sm:$0xff]
          %v747 = vld [vmem:[%s140 + $0x1b0] sm:$0xff]
          %v748 = vld [vmem:[%s140 + $0x1b8] sm:$0xff]
          %v749 = vld [vmem:[%s140 + $0x1c0] sm:$0xff]
          %v750 = vld [vmem:[%s140 + $0x1c8] sm:$0xff]
          %v751 = vld [vmem:[%s140 + $0x1d0] sm:$0xff]
          %v752 = vld [vmem:[%s140 + $0x1d8] sm:$0xff]
          %v753 = vld [vmem:[%s140 + $0x1e0] sm:$0xff]
          %v754 = vld [vmem:[%s140 + $0x1e8] sm:$0xff]
          %v755 = vld [vmem:[%s140 + $0x1f0] sm:$0xff]
          %v756 = vld [vmem:[%s140 + $0x1f8] sm:$0xff]
          %v757 = vld [vmem:[%s140 + $0x200] sm:$0xff]
          %v758 = vld [vmem:[%s140 + $0x208] sm:$0xff]
          %v759 = vld [vmem:[%s140 + $0x210] sm:$0xff]
          %v760 = vld [vmem:[%s140 + $0x218] sm:$0xff]
          %v761 = vld [vmem:[%s140 + $0x220] sm:$0xff]
          %v762 = vld [vmem:[%s140 + $0x228] sm:$0xff]
          %v763 = vld [vmem:[%s140 + $0x230] sm:$0xff]
          %v764 = vld [vmem:[%s140 + $0x238] sm:$0xff]
          %v765 = vld [vmem:[%s140 + $0x240] sm:$0xff]
          %v766 = vld [vmem:[%s140 + $0x248] sm:$0xff]
          %v767 = vld [vmem:[%s140 + $0x250] sm:$0xff]
          %v768 = vld [vmem:[%s140 + $0x258] sm:$0xff]
          %v769 = vld [vmem:[%s140 + $0x260] sm:$0xff]
          %v770 = vld [vmem:[%s140 + $0x268] sm:$0xff]
          %v771 = vld [vmem:[%s140 + $0x270] sm:$0xff]
          %v772 = vld [vmem:[%s140 + $0x278] sm:$0xff]
          %v773 = vld [vmem:[%s140 + $0x280] sm:$0xff]
          %v774 = vld [vmem:[%s140 + $0x288] sm:$0xff]
          %v775 = vld [vmem:[%s140 + $0x290] sm:$0xff]
          %v776 = vld [vmem:[%s140 + $0x298] sm:$0xff]
          %v777 = vld [vmem:[%s140 + $0x2a0] sm:$0xff]
          %v778 = vld [vmem:[%s140 + $0x2a8] sm:$0xff]
          %v779 = vld [vmem:[%s140 + $0x2b0] sm:$0xff]
          %v780 = vld [vmem:[%s140 + $0x2b8] sm:$0xff]
          %v781 = vld [vmem:[%s140 + $0x2c0] sm:$0xff]
          %v782 = vld [vmem:[%s140 + $0x2c8] sm:$0xff]
          %v783 = vld [vmem:[%s140 + $0x2d0] sm:$0xff]
          %v784 = vld [vmem:[%s140 + $0x2d8] sm:$0xff]
          %v785 = vld [vmem:[%s140 + $0x2e0] sm:$0xff]
          %v786 = vld [vmem:[%s140 + $0x2e8] sm:$0xff]
          %v787 = vld [vmem:[%s140 + $0x2f0] sm:$0xff]
          %v788 = vld [vmem:[%s140 + $0x2f8] sm:$0xff]
          %v789 = vld [vmem:[%s140 + $0x300] sm:$0xff]
          %v790 = vld [vmem:[%s140 + $0x308] sm:$0xff]
          %v791 = vld [vmem:[%s140 + $0x310] sm:$0xff]
          %v792 = vld [vmem:[%s140 + $0x318] sm:$0xff]
          %v793 = vld [vmem:[%s140 + $0x320] sm:$0xff]
          %v794 = vld [vmem:[%s140 + $0x328] sm:$0xff]
          %v795 = vld [vmem:[%s140 + $0x330] sm:$0xff]
          %v796 = vld [vmem:[%s140 + $0x338] sm:$0xff]
          %v797 = vld [vmem:[%s140 + $0x340] sm:$0xff]
          %v798 = vld [vmem:[%s140 + $0x348] sm:$0xff]
          %v799 = vld [vmem:[%s140 + $0x350] sm:$0xff]
          %v800 = vld [vmem:[%s140 + $0x358] sm:$0xff]
          %v801 = vld [vmem:[%s140 + $0x360] sm:$0xff]
          %v802 = vld [vmem:[%s140 + $0x368] sm:$0xff]
          %v803 = vld [vmem:[%s140 + $0x370] sm:$0xff]
          %v804 = vld [vmem:[%s140 + $0x378] sm:$0xff]
          %v805 = vld [vmem:[%s140 + $0x380] sm:$0xff]
          %v806 = vld [vmem:[%s140 + $0x388] sm:$0xff]
          %v807 = vld [vmem:[%s140 + $0x390] sm:$0xff]
          %v808 = vld [vmem:[%s140 + $0x398] sm:$0xff]
          %v809 = vld [vmem:[%s140 + $0x3a0] sm:$0xff]
          %v810 = vld [vmem:[%s140 + $0x3a8] sm:$0xff]
          %v811 = vld [vmem:[%s140 + $0x3b0] sm:$0xff]
          %v812 = vld [vmem:[%s140 + $0x3b8] sm:$0xff]
          %v813 = vld [vmem:[%s140 + $0x3c0] sm:$0xff]
          %v814 = vld [vmem:[%s140 + $0x3c8] sm:$0xff]
          %v815 = vld [vmem:[%s140 + $0x3d0] sm:$0xff]
          %v816 = vld [vmem:[%s140 + $0x3d8] sm:$0xff]
          %v817 = vld [vmem:[%s140 + $0x3e0] sm:$0xff]
          %v818 = vld [vmem:[%s140 + $0x3e8] sm:$0xff]
          %v819 = vld [vmem:[%s140 + $0x3f0] sm:$0xff]
          %v820 = vld [vmem:[%s140 + $0x3f8] sm:$0xff]
          %v821 = vld [vmem:[%s140 + $0x400] sm:$0xff]
          %v822 = vld [vmem:[%s140 + $0x408] sm:$0xff]
          %v823 = vld [vmem:[%s140 + $0x410] sm:$0xff]
          %v824 = vld [vmem:[%s140 + $0x418] sm:$0xff]
          %v825 = vld [vmem:[%s140 + $0x420] sm:$0xff]
          %v826 = vld [vmem:[%s140 + $0x428] sm:$0xff]
          %v827 = vld [vmem:[%s140 + $0x430] sm:$0xff]
          %v828 = vld [vmem:[%s140 + $0x438] sm:$0xff]
          %v829 = vld [vmem:[%s140 + $0x440] sm:$0xff]
          %v830 = vld [vmem:[%s140 + $0x448] sm:$0xff]
          %v831 = vld [vmem:[%s140 + $0x450] sm:$0xff]
          %v832 = vld [vmem:[%s140 + $0x458] sm:$0xff]
          %v833 = vld [vmem:[%s140 + $0x460] sm:$0xff]
          %v834 = vld [vmem:[%s140 + $0x468] sm:$0xff]
          %v835 = vld [vmem:[%s140 + $0x470] sm:$0xff]
          %v836 = vld [vmem:[%s140 + $0x478] sm:$0xff]
          %v837 = vld [vmem:[%s140 + $0x480] sm:$0xff]
          %v838 = vld [vmem:[%s140 + $0x488] sm:$0xff]
          %v839 = vld [vmem:[%s140 + $0x490] sm:$0xff]
          %v840 = vld [vmem:[%s140 + $0x498] sm:$0xff]
          %v841 = vld [vmem:[%s140 + $0x4a0] sm:$0xff]
          %v842 = vld [vmem:[%s140 + $0x4a8] sm:$0xff]
          %v843 = vld [vmem:[%s140 + $0x4b0] sm:$0xff]
          %v844 = vld [vmem:[%s140 + $0x4b8] sm:$0xff]
          %v845 = vld [vmem:[%s140 + $0x4c0] sm:$0xff]
          %v846 = vld [vmem:[%s140 + $0x4c8] sm:$0xff]
          %v847 = vld [vmem:[%s140 + $0x4d0] sm:$0xff]
          %v848 = vld [vmem:[%s140 + $0x4d8] sm:$0xff]
          %v849 = vld [vmem:[%s140 + $0x4e0] sm:$0xff]
          %v850 = vld [vmem:[%s140 + $0x4e8] sm:$0xff]
          %v851 = vld [vmem:[%s140 + $0x4f0] sm:$0xff]
          %v852 = vld [vmem:[%s140 + $0x4f8] sm:$0xff]
          %v853 = vld [vmem:[%s140 + $0x500] sm:$0xff]
          %v854 = vld [vmem:[%s140 + $0x508] sm:$0xff]
          %v855 = vld [vmem:[%s140 + $0x510] sm:$0xff]
          %v856 = vld [vmem:[%s140 + $0x518] sm:$0xff]
          %v857 = vld [vmem:[%s140 + $0x520] sm:$0xff]
          %v858 = vld [vmem:[%s140 + $0x528] sm:$0xff]
          %v859 = vld [vmem:[%s140 + $0x530] sm:$0xff]
          %v860 = vld [vmem:[%s140 + $0x538] sm:$0xff]
          %v861 = vld [vmem:[%s140 + $0x540] sm:$0xff]
          %v862 = vld [vmem:[%s140 + $0x548] sm:$0xff]
          %v863 = vld [vmem:[%s140 + $0x550] sm:$0xff]
          %v864 = vld [vmem:[%s140 + $0x558] sm:$0xff]
          %v865 = vld [vmem:[%s140 + $0x560] sm:$0xff]
          %v866 = vld [vmem:[%s140 + $0x568] sm:$0xff]
          %v867 = vld [vmem:[%s140 + $0x570] sm:$0xff]
          %v868 = vld [vmem:[%s140 + $0x578] sm:$0xff]
          %v869 = vld [vmem:[%s140 + $0x580] sm:$0xff]
          %v870 = vld [vmem:[%s140 + $0x588] sm:$0xff]
          %v871 = vld [vmem:[%s140 + $0x590] sm:$0xff]
          %v872 = vld [vmem:[%s140 + $0x598] sm:$0xff]
          %v873 = vld [vmem:[%s140 + $0x5a0] sm:$0xff]
          %v874 = vld [vmem:[%s140 + $0x5a8] sm:$0xff]
          %v875 = vld [vmem:[%s140 + $0x5b0] sm:$0xff]
          %v876 = vld [vmem:[%s140 + $0x5b8] sm:$0xff]
          %v877 = vld [vmem:[%s140 + $0x5c0] sm:$0xff]
          %v878 = vld [vmem:[%s140 + $0x5c8] sm:$0xff]
          %v879 = vld [vmem:[%s140 + $0x5d0] sm:$0xff]
          %v880 = vld [vmem:[%s140 + $0x5d8] sm:$0xff]
          %v881 = vld [vmem:[%s140 + $0x5e0] sm:$0xff]
          %v882 = vld [vmem:[%s140 + $0x5e8] sm:$0xff]
          %v883 = vld [vmem:[%s140 + $0x5f0] sm:$0xff]
          %v884 = vld [vmem:[%s140 + $0x5f8] sm:$0xff]
          %v885 = vld [vmem:[%s140 + $0x600] sm:$0xff]
          %v886 = vld [vmem:[%s140 + $0x608] sm:$0xff]
          %v887 = vld [vmem:[%s140 + $0x610] sm:$0xff]
          %v888 = vld [vmem:[%s140 + $0x618] sm:$0xff]
          %v889 = vld [vmem:[%s140 + $0x620] sm:$0xff]
          %v890 = vld [vmem:[%s140 + $0x628] sm:$0xff]
          %v891 = vld [vmem:[%s140 + $0x630] sm:$0xff]
          %v892 = vld [vmem:[%s140 + $0x638] sm:$0xff]
          %v893 = vld [vmem:[%s140 + $0x640] sm:$0xff]
          %v894 = vld [vmem:[%s140 + $0x648] sm:$0xff]
          %v895 = vld [vmem:[%s140 + $0x650] sm:$0xff]
          %v896 = vld [vmem:[%s140 + $0x658] sm:$0xff]
          %v897 = vld [vmem:[%s140 + $0x660] sm:$0xff]
          %v898 = vld [vmem:[%s140 + $0x668] sm:$0xff]
          %v899 = vld [vmem:[%s140 + $0x670] sm:$0xff]
          %v900 = vld [vmem:[%s140 + $0x678] sm:$0xff]
          %v901 = vld [vmem:[%s140 + $0x680] sm:$0xff]
          %v902 = vld [vmem:[%s140 + $0x688] sm:$0xff]
          %v903 = vld [vmem:[%s140 + $0x690] sm:$0xff]
          %v904 = vld [vmem:[%s140 + $0x698] sm:$0xff]
          %v905 = vld [vmem:[%s140 + $0x6a0] sm:$0xff]
          %v906 = vld [vmem:[%s140 + $0x6a8] sm:$0xff]
          %v907 = vld [vmem:[%s140 + $0x6b0] sm:$0xff]
          %v908 = vld [vmem:[%s140 + $0x6b8] sm:$0xff]
          %v909 = vld [vmem:[%s140 + $0x6c0] sm:$0xff]
          %v910 = vld [vmem:[%s140 + $0x6c8] sm:$0xff]
          %v911 = vld [vmem:[%s140 + $0x6d0] sm:$0xff]
          %v912 = vld [vmem:[%s140 + $0x6d8] sm:$0xff]
          %v913 = vld [vmem:[%s140 + $0x6e0] sm:$0xff]
          %v914 = vld [vmem:[%s140 + $0x6e8] sm:$0xff]
          %v915 = vld [vmem:[%s140 + $0x6f0] sm:$0xff]
          %v916 = vld [vmem:[%s140 + $0x6f8] sm:$0xff]
          %v917 = vld [vmem:[%s140 + $0x700] sm:$0xff]
          %v918 = vld [vmem:[%s140 + $0x708] sm:$0xff]
          %v919 = vld [vmem:[%s140 + $0x710] sm:$0xff]
          %v920 = vld [vmem:[%s140 + $0x718] sm:$0xff]
          %v921 = vld [vmem:[%s140 + $0x720] sm:$0xff]
          %v922 = vld [vmem:[%s140 + $0x728] sm:$0xff]
          %v923 = vld [vmem:[%s140 + $0x730] sm:$0xff]
          %v924 = vld [vmem:[%s140 + $0x738] sm:$0xff]
          %v925 = vld [vmem:[%s140 + $0x740] sm:$0xff]
          %v926 = vld [vmem:[%s140 + $0x748] sm:$0xff]
          %v927 = vld [vmem:[%s140 + $0x750] sm:$0xff]
          %v928 = vld [vmem:[%s140 + $0x758] sm:$0xff]
          %v929 = vld [vmem:[%s140 + $0x760] sm:$0xff]
          %v930 = vld [vmem:[%s140 + $0x768] sm:$0xff]
          %v931 = vld [vmem:[%s140 + $0x770] sm:$0xff]
          %v932 = vld [vmem:[%s140 + $0x778] sm:$0xff]
          %v933 = vld [vmem:[%s140 + $0x780] sm:$0xff]
          %v934 = vld [vmem:[%s140 + $0x788] sm:$0xff]
          %v935 = vld [vmem:[%s140 + $0x790] sm:$0xff]
          %v936 = vld [vmem:[%s140 + $0x798] sm:$0xff]
          %v937 = vld [vmem:[%s140 + $0x7a0] sm:$0xff]
          %v938 = vld [vmem:[%s140 + $0x7a8] sm:$0xff]
          %v939 = vld [vmem:[%s140 + $0x7b0] sm:$0xff]
          %v940 = vld [vmem:[%s140 + $0x7b8] sm:$0xff]
          %v941 = vld [vmem:[%s140 + $0x7c0] sm:$0xff]
          %v942 = vld [vmem:[%s140 + $0x7c8] sm:$0xff]
          %v943 = vld [vmem:[%s140 + $0x7d0] sm:$0xff]
          %v944 = vld [vmem:[%s140 + $0x7d8] sm:$0xff]
          %v945 = vld [vmem:[%s140 + $0x7e0] sm:$0xff]
          %v946 = vld [vmem:[%s140 + $0x7e8] sm:$0xff]
          %v947 = vld [vmem:[%s140 + $0x7f0] sm:$0xff]
          %v948 = vld [vmem:[%s140 + $0x7f8] sm:$0xff]
          %v949 = vlaneseq
          %v950 = vshrl.u32 %v949, 7
          %v951 = vadd.s32 %v950, 8
          %v952 = vadd.s32 %v950, 16
          %v953 = vadd.s32 %v950, 24
          %v954 = vadd.s32 %v950, 32
          %v955 = vadd.s32 %v950, 40
          %v956 = vadd.s32 %v950, 48
          %v957 = vadd.s32 %v950, 56
          %v958 = vadd.s32 %v950, 64
          %v959 = vadd.s32 %v950, 72
          %v960 = vadd.s32 %v950, 80
          %v961 = vadd.s32 %v950, 88
          %v962 = vadd.s32 %v950, 96
          %v963 = vadd.s32 %v950, 104
          %v964 = vadd.s32 %v950, 112
          %v965 = vadd.s32 %v950, 120
          %v966 = vadd.s32 %v950, 128
          %v967 = vadd.s32 %v950, 136
          %v968 = vadd.s32 %v950, 144
          %v969 = vadd.s32 %v950, 152
          %v970 = vadd.s32 %v950, 160
          %v971 = vadd.s32 %v950, 168
          %v972 = vadd.s32 %v950, 176
          %v973 = vadd.s32 %v950, 184
          %v974 = vadd.s32 %v950, 192
          %v975 = vadd.s32 %v950, 200
          %v976 = vadd.s32 %v950, 208
          %v977 = vadd.s32 %v950, 216
          %v978 = vadd.s32 %v950, 224
          %v979 = vadd.s32 %v950, 232
          %v980 = vadd.s32 %v950, 240
          %v981 = vadd.s32 %v950, 248
          %v982 = vadd.s32 %v950, 256
          %v983 = vadd.s32 %v950, 264
          %v984 = vadd.s32 %v950, 272
          %v985 = vadd.s32 %v950, 280
          %v986 = vadd.s32 %v950, 288
          %v987 = vadd.s32 %v950, 296
          %v988 = vadd.s32 %v950, 304
          %v989 = vadd.s32 %v950, 312
          %v990 = vadd.s32 %v950, 320
          %v991 = vadd.s32 %v950, 328
          %v992 = vadd.s32 %v950, 336
          %v993 = vadd.s32 %v950, 344
          %v994 = vadd.s32 %v950, 352
          %v995 = vadd.s32 %v950, 360
          %v996 = vadd.s32 %v950, 368
          %v997 = vadd.s32 %v950, 376
          %v998 = vadd.s32 %v950, 384
          %v999 = vadd.s32 %v950, 392
          %v1000 = vadd.s32 %v950, 400
          %v1001 = vadd.s32 %v950, 408
          %v1002 = vadd.s32 %v950, 416
          %v1003 = vadd.s32 %v950, 424
          %v1004 = vadd.s32 %v950, 432
          %v1005 = vadd.s32 %v950, 440
          %v1006 = vadd.s32 %v950, 448
          %v1007 = vadd.s32 %v950, 456
          %v1008 = vadd.s32 %v950, 464
          %v1009 = vadd.s32 %v950, 472
          %v1010 = vadd.s32 %v950, 480
          %v1011 = vadd.s32 %v950, 488
          %v1012 = vadd.s32 %v950, 496
          %v1013 = vadd.s32 %v950, 504
          %v1014 = vadd.s32 %v950, 512
          %v1015 = vadd.s32 %v950, 520
          %v1016 = vadd.s32 %v950, 528
          %v1017 = vadd.s32 %v950, 536
          %v1018 = vadd.s32 %v950, 544
          %v1019 = vadd.s32 %v950, 552
          %v1020 = vadd.s32 %v950, 560
          %v1021 = vadd.s32 %v950, 568
          %v1022 = vadd.s32 %v950, 576
          %v1023 = vadd.s32 %v950, 584
          %v1024 = vadd.s32 %v950, 592
          %v1025 = vadd.s32 %v950, 600
          %v1026 = vadd.s32 %v950, 608
          %v1027 = vadd.s32 %v950, 616
          %v1028 = vadd.s32 %v950, 624
          %v1029 = vadd.s32 %v950, 632
          %v1030 = vadd.s32 %v950, 640
          %v1031 = vadd.s32 %v950, 648
          %v1032 = vadd.s32 %v950, 656
          %v1033 = vadd.s32 %v950, 664
          %v1034 = vadd.s32 %v950, 672
          %v1035 = vadd.s32 %v950, 680
          %v1036 = vadd.s32 %v950, 688
          %v1037 = vadd.s32 %v950, 696
          %v1038 = vadd.s32 %v950, 704
          %v1039 = vadd.s32 %v950, 712
          %v1040 = vadd.s32 %v950, 720
          %v1041 = vadd.s32 %v950, 728
          %v1042 = vadd.s32 %v950, 736
          %v1043 = vadd.s32 %v950, 744
          %v1044 = vadd.s32 %v950, 752
          %v1045 = vadd.s32 %v950, 760
          %v1046 = vadd.s32 %v950, 768
          %v1047 = vadd.s32 %v950, 776
          %v1048 = vadd.s32 %v950, 784
          %v1049 = vadd.s32 %v950, 792
          %v1050 = vadd.s32 %v950, 800
          %v1051 = vadd.s32 %v950, 808
          %v1052 = vadd.s32 %v950, 816
          %v1053 = vadd.s32 %v950, 824
          %v1054 = vadd.s32 %v950, 832
          %v1055 = vadd.s32 %v950, 840
          %v1056 = vadd.s32 %v950, 848
          %v1057 = vadd.s32 %v950, 856
          %v1058 = vadd.s32 %v950, 864
          %v1059 = vadd.s32 %v950, 872
          %v1060 = vadd.s32 %v950, 880
          %v1061 = vadd.s32 %v950, 888
          %v1062 = vadd.s32 %v950, 896
          %v1063 = vadd.s32 %v950, 904
          %v1064 = vadd.s32 %v950, 912
          %v1065 = vadd.s32 %v950, 920
          %v1066 = vadd.s32 %v950, 928
          %v1067 = vadd.s32 %v950, 936
          %v1068 = vadd.s32 %v950, 944
          %v1069 = vadd.s32 %v950, 952
          %v1070 = vadd.s32 %v950, 960
          %v1071 = vadd.s32 %v950, 968
          %v1072 = vadd.s32 %v950, 976
          %v1073 = vadd.s32 %v950, 984
          %v1074 = vadd.s32 %v950, 992
          %v1075 = vadd.s32 %v950, 1000
          %v1076 = vadd.s32 %v950, 1008
          %v1077 = vadd.s32 %v950, 1016
          %s1078 = smul.u32 %s21, 1024
          %v1079 = vstv %s1078
          %v1080 = vadd.s32 %v950, %v1079
          %v1081 = vadd.s32 %v951, %v1079
          %v1082 = vadd.s32 %v952, %v1079
          %v1083 = vadd.s32 %v953, %v1079
          %v1084 = vadd.s32 %v954, %v1079
          %v1085 = vadd.s32 %v955, %v1079
          %v1086 = vadd.s32 %v956, %v1079
          %v1087 = vadd.s32 %v957, %v1079
          %v1088 = vadd.s32 %v958, %v1079
          %v1089 = vadd.s32 %v959, %v1079
          %v1090 = vadd.s32 %v960, %v1079
          %v1091 = vadd.s32 %v961, %v1079
          %v1092 = vadd.s32 %v962, %v1079
          %v1093 = vadd.s32 %v963, %v1079
          %v1094 = vadd.s32 %v964, %v1079
          %v1095 = vadd.s32 %v965, %v1079
          %v1096 = vadd.s32 %v966, %v1079
          %v1097 = vadd.s32 %v967, %v1079
          %v1098 = vadd.s32 %v968, %v1079
          %v1099 = vadd.s32 %v969, %v1079
          %v1100 = vadd.s32 %v970, %v1079
          %v1101 = vadd.s32 %v971, %v1079
          %v1102 = vadd.s32 %v972, %v1079
          %v1103 = vadd.s32 %v973, %v1079
          %v1104 = vadd.s32 %v974, %v1079
          %v1105 = vadd.s32 %v975, %v1079
          %v1106 = vadd.s32 %v976, %v1079
          %v1107 = vadd.s32 %v977, %v1079
          %v1108 = vadd.s32 %v978, %v1079
          %v1109 = vadd.s32 %v979, %v1079
          %v1110 = vadd.s32 %v980, %v1079
          %v1111 = vadd.s32 %v981, %v1079
          %v1112 = vadd.s32 %v982, %v1079
          %v1113 = vadd.s32 %v983, %v1079
          %v1114 = vadd.s32 %v984, %v1079
          %v1115 = vadd.s32 %v985, %v1079
          %v1116 = vadd.s32 %v986, %v1079
          %v1117 = vadd.s32 %v987, %v1079
          %v1118 = vadd.s32 %v988, %v1079
          %v1119 = vadd.s32 %v989, %v1079
          %v1120 = vadd.s32 %v990, %v1079
          %v1121 = vadd.s32 %v991, %v1079
          %v1122 = vadd.s32 %v992, %v1079
          %v1123 = vadd.s32 %v993, %v1079
          %v1124 = vadd.s32 %v994, %v1079
          %v1125 = vadd.s32 %v995, %v1079
          %v1126 = vadd.s32 %v996, %v1079
          %v1127 = vadd.s32 %v997, %v1079
          %v1128 = vadd.s32 %v998, %v1079
          %v1129 = vadd.s32 %v999, %v1079
          %v1130 = vadd.s32 %v1000, %v1079
          %v1131 = vadd.s32 %v1001, %v1079
          %v1132 = vadd.s32 %v1002, %v1079
          %v1133 = vadd.s32 %v1003, %v1079
          %v1134 = vadd.s32 %v1004, %v1079
          %v1135 = vadd.s32 %v1005, %v1079
          %v1136 = vadd.s32 %v1006, %v1079
          %v1137 = vadd.s32 %v1007, %v1079
          %v1138 = vadd.s32 %v1008, %v1079
          %v1139 = vadd.s32 %v1009, %v1079
          %v1140 = vadd.s32 %v1010, %v1079
          %v1141 = vadd.s32 %v1011, %v1079
          %v1142 = vadd.s32 %v1012, %v1079
          %v1143 = vadd.s32 %v1013, %v1079
          %v1144 = vadd.s32 %v1014, %v1079
          %v1145 = vadd.s32 %v1015, %v1079
          %v1146 = vadd.s32 %v1016, %v1079
          %v1147 = vadd.s32 %v1017, %v1079
          %v1148 = vadd.s32 %v1018, %v1079
          %v1149 = vadd.s32 %v1019, %v1079
          %v1150 = vadd.s32 %v1020, %v1079
          %v1151 = vadd.s32 %v1021, %v1079
          %v1152 = vadd.s32 %v1022, %v1079
          %v1153 = vadd.s32 %v1023, %v1079
          %v1154 = vadd.s32 %v1024, %v1079
          %v1155 = vadd.s32 %v1025, %v1079
          %v1156 = vadd.s32 %v1026, %v1079
          %v1157 = vadd.s32 %v1027, %v1079
          %v1158 = vadd.s32 %v1028, %v1079
          %v1159 = vadd.s32 %v1029, %v1079
          %v1160 = vadd.s32 %v1030, %v1079
          %v1161 = vadd.s32 %v1031, %v1079
          %v1162 = vadd.s32 %v1032, %v1079
          %v1163 = vadd.s32 %v1033, %v1079
          %v1164 = vadd.s32 %v1034, %v1079
          %v1165 = vadd.s32 %v1035, %v1079
          %v1166 = vadd.s32 %v1036, %v1079
          %v1167 = vadd.s32 %v1037, %v1079
          %v1168 = vadd.s32 %v1038, %v1079
          %v1169 = vadd.s32 %v1039, %v1079
          %v1170 = vadd.s32 %v1040, %v1079
          %v1171 = vadd.s32 %v1041, %v1079
          %v1172 = vadd.s32 %v1042, %v1079
          %v1173 = vadd.s32 %v1043, %v1079
          %v1174 = vadd.s32 %v1044, %v1079
          %v1175 = vadd.s32 %v1045, %v1079
          %v1176 = vadd.s32 %v1046, %v1079
          %v1177 = vadd.s32 %v1047, %v1079
          %v1178 = vadd.s32 %v1048, %v1079
          %v1179 = vadd.s32 %v1049, %v1079
          %v1180 = vadd.s32 %v1050, %v1079
          %v1181 = vadd.s32 %v1051, %v1079
          %v1182 = vadd.s32 %v1052, %v1079
          %v1183 = vadd.s32 %v1053, %v1079
          %v1184 = vadd.s32 %v1054, %v1079
          %v1185 = vadd.s32 %v1055, %v1079
          %v1186 = vadd.s32 %v1056, %v1079
          %v1187 = vadd.s32 %v1057, %v1079
          %v1188 = vadd.s32 %v1058, %v1079
          %v1189 = vadd.s32 %v1059, %v1079
          %v1190 = vadd.s32 %v1060, %v1079
          %v1191 = vadd.s32 %v1061, %v1079
          %v1192 = vadd.s32 %v1062, %v1079
          %v1193 = vadd.s32 %v1063, %v1079
          %v1194 = vadd.s32 %v1064, %v1079
          %v1195 = vadd.s32 %v1065, %v1079
          %v1196 = vadd.s32 %v1066, %v1079
          %v1197 = vadd.s32 %v1067, %v1079
          %v1198 = vadd.s32 %v1068, %v1079
          %v1199 = vadd.s32 %v1069, %v1079
          %v1200 = vadd.s32 %v1070, %v1079
          %v1201 = vadd.s32 %v1071, %v1079
          %v1202 = vadd.s32 %v1072, %v1079
          %v1203 = vadd.s32 %v1073, %v1079
          %v1204 = vadd.s32 %v1074, %v1079
          %v1205 = vadd.s32 %v1075, %v1079
          %v1206 = vadd.s32 %v1076, %v1079
          %v1207 = vadd.s32 %v1077, %v1079
          %vm1208 = vcmp.lt.s32.totalorder %v1080, 1030
          %vm1209 = vcmp.lt.s32.totalorder %v1081, 1030
          %vm1210 = vcmp.lt.s32.totalorder %v1082, 1030
          %vm1211 = vcmp.lt.s32.totalorder %v1083, 1030
          %vm1212 = vcmp.lt.s32.totalorder %v1084, 1030
          %vm1213 = vcmp.lt.s32.totalorder %v1085, 1030
          %vm1214 = vcmp.lt.s32.totalorder %v1086, 1030
          %vm1215 = vcmp.lt.s32.totalorder %v1087, 1030
          %vm1216 = vcmp.lt.s32.totalorder %v1088, 1030
          %vm1217 = vcmp.lt.s32.totalorder %v1089, 1030
          %vm1218 = vcmp.lt.s32.totalorder %v1090, 1030
          %vm1219 = vcmp.lt.s32.totalorder %v1091, 1030
          %vm1220 = vcmp.lt.s32.totalorder %v1092, 1030
          %vm1221 = vcmp.lt.s32.totalorder %v1093, 1030
          %vm1222 = vcmp.lt.s32.totalorder %v1094, 1030
          %vm1223 = vcmp.lt.s32.totalorder %v1095, 1030
          %vm1224 = vcmp.lt.s32.totalorder %v1096, 1030
          %vm1225 = vcmp.lt.s32.totalorder %v1097, 1030
          %vm1226 = vcmp.lt.s32.totalorder %v1098, 1030
          %vm1227 = vcmp.lt.s32.totalorder %v1099, 1030
          %vm1228 = vcmp.lt.s32.totalorder %v1100, 1030
          %vm1229 = vcmp.lt.s32.totalorder %v1101, 1030
          %vm1230 = vcmp.lt.s32.totalorder %v1102, 1030
          %vm1231 = vcmp.lt.s32.totalorder %v1103, 1030
          %vm1232 = vcmp.lt.s32.totalorder %v1104, 1030
          %vm1233 = vcmp.lt.s32.totalorder %v1105, 1030
          %vm1234 = vcmp.lt.s32.totalorder %v1106, 1030
          %vm1235 = vcmp.lt.s32.totalorder %v1107, 1030
          %vm1236 = vcmp.lt.s32.totalorder %v1108, 1030
          %vm1237 = vcmp.lt.s32.totalorder %v1109, 1030
          %vm1238 = vcmp.lt.s32.totalorder %v1110, 1030
          %vm1239 = vcmp.lt.s32.totalorder %v1111, 1030
          %vm1240 = vcmp.lt.s32.totalorder %v1112, 1030
          %vm1241 = vcmp.lt.s32.totalorder %v1113, 1030
          %vm1242 = vcmp.lt.s32.totalorder %v1114, 1030
          %vm1243 = vcmp.lt.s32.totalorder %v1115, 1030
          %vm1244 = vcmp.lt.s32.totalorder %v1116, 1030
          %vm1245 = vcmp.lt.s32.totalorder %v1117, 1030
          %vm1246 = vcmp.lt.s32.totalorder %v1118, 1030
          %vm1247 = vcmp.lt.s32.totalorder %v1119, 1030
          %vm1248 = vcmp.lt.s32.totalorder %v1120, 1030
          %vm1249 = vcmp.lt.s32.totalorder %v1121, 1030
          %vm1250 = vcmp.lt.s32.totalorder %v1122, 1030
          %vm1251 = vcmp.lt.s32.totalorder %v1123, 1030
          %vm1252 = vcmp.lt.s32.totalorder %v1124, 1030
          %vm1253 = vcmp.lt.s32.totalorder %v1125, 1030
          %vm1254 = vcmp.lt.s32.totalorder %v1126, 1030
          %vm1255 = vcmp.lt.s32.totalorder %v1127, 1030
          %vm1256 = vcmp.lt.s32.totalorder %v1128, 1030
          %vm1257 = vcmp.lt.s32.totalorder %v1129, 1030
          %vm1258 = vcmp.lt.s32.totalorder %v1130, 1030
          %vm1259 = vcmp.lt.s32.totalorder %v1131, 1030
          %vm1260 = vcmp.lt.s32.totalorder %v1132, 1030
          %vm1261 = vcmp.lt.s32.totalorder %v1133, 1030
          %vm1262 = vcmp.lt.s32.totalorder %v1134, 1030
          %vm1263 = vcmp.lt.s32.totalorder %v1135, 1030
          %vm1264 = vcmp.lt.s32.totalorder %v1136, 1030
          %vm1265 = vcmp.lt.s32.totalorder %v1137, 1030
          %vm1266 = vcmp.lt.s32.totalorder %v1138, 1030
          %vm1267 = vcmp.lt.s32.totalorder %v1139, 1030
          %vm1268 = vcmp.lt.s32.totalorder %v1140, 1030
          %vm1269 = vcmp.lt.s32.totalorder %v1141, 1030
          %vm1270 = vcmp.lt.s32.totalorder %v1142, 1030
          %vm1271 = vcmp.lt.s32.totalorder %v1143, 1030
          %vm1272 = vcmp.lt.s32.totalorder %v1144, 1030
          %vm1273 = vcmp.lt.s32.totalorder %v1145, 1030
          %vm1274 = vcmp.lt.s32.totalorder %v1146, 1030
          %vm1275 = vcmp.lt.s32.totalorder %v1147, 1030
          %vm1276 = vcmp.lt.s32.totalorder %v1148, 1030
          %vm1277 = vcmp.lt.s32.totalorder %v1149, 1030
          %vm1278 = vcmp.lt.s32.totalorder %v1150, 1030
          %vm1279 = vcmp.lt.s32.totalorder %v1151, 1030
          %vm1280 = vcmp.lt.s32.totalorder %v1152, 1030
          %vm1281 = vcmp.lt.s32.totalorder %v1153, 1030
          %vm1282 = vcmp.lt.s32.totalorder %v1154, 1030
          %vm1283 = vcmp.lt.s32.totalorder %v1155, 1030
          %vm1284 = vcmp.lt.s32.totalorder %v1156, 1030
          %vm1285 = vcmp.lt.s32.totalorder %v1157, 1030
          %vm1286 = vcmp.lt.s32.totalorder %v1158, 1030
          %vm1287 = vcmp.lt.s32.totalorder %v1159, 1030
          %vm1288 = vcmp.lt.s32.totalorder %v1160, 1030
          %vm1289 = vcmp.lt.s32.totalorder %v1161, 1030
          %vm1290 = vcmp.lt.s32.totalorder %v1162, 1030
          %vm1291 = vcmp.lt.s32.totalorder %v1163, 1030
          %vm1292 = vcmp.lt.s32.totalorder %v1164, 1030
          %vm1293 = vcmp.lt.s32.totalorder %v1165, 1030
          %vm1294 = vcmp.lt.s32.totalorder %v1166, 1030
          %vm1295 = vcmp.lt.s32.totalorder %v1167, 1030
          %vm1296 = vcmp.lt.s32.totalorder %v1168, 1030
          %vm1297 = vcmp.lt.s32.totalorder %v1169, 1030
          %vm1298 = vcmp.lt.s32.totalorder %v1170, 1030
          %vm1299 = vcmp.lt.s32.totalorder %v1171, 1030
          %vm1300 = vcmp.lt.s32.totalorder %v1172, 1030
          %vm1301 = vcmp.lt.s32.totalorder %v1173, 1030
          %vm1302 = vcmp.lt.s32.totalorder %v1174, 1030
          %vm1303 = vcmp.lt.s32.totalorder %v1175, 1030
          %vm1304 = vcmp.lt.s32.totalorder %v1176, 1030
          %vm1305 = vcmp.lt.s32.totalorder %v1177, 1030
          %vm1306 = vcmp.lt.s32.totalorder %v1178, 1030
          %vm1307 = vcmp.lt.s32.totalorder %v1179, 1030
          %vm1308 = vcmp.lt.s32.totalorder %v1180, 1030
          %vm1309 = vcmp.lt.s32.totalorder %v1181, 1030
          %vm1310 = vcmp.lt.s32.totalorder %v1182, 1030
          %vm1311 = vcmp.lt.s32.totalorder %v1183, 1030
          %vm1312 = vcmp.lt.s32.totalorder %v1184, 1030
          %vm1313 = vcmp.lt.s32.totalorder %v1185, 1030
          %vm1314 = vcmp.lt.s32.totalorder %v1186, 1030
          %vm1315 = vcmp.lt.s32.totalorder %v1187, 1030
          %vm1316 = vcmp.lt.s32.totalorder %v1188, 1030
          %vm1317 = vcmp.lt.s32.totalorder %v1189, 1030
          %vm1318 = vcmp.lt.s32.totalorder %v1190, 1030
          %vm1319 = vcmp.lt.s32.totalorder %v1191, 1030
          %vm1320 = vcmp.lt.s32.totalorder %v1192, 1030
          %vm1321 = vcmp.lt.s32.totalorder %v1193, 1030
          %vm1322 = vcmp.lt.s32.totalorder %v1194, 1030
          %vm1323 = vcmp.lt.s32.totalorder %v1195, 1030
          %vm1324 = vcmp.lt.s32.totalorder %v1196, 1030
          %vm1325 = vcmp.lt.s32.totalorder %v1197, 1030
          %vm1326 = vcmp.lt.s32.totalorder %v1198, 1030
          %vm1327 = vcmp.lt.s32.totalorder %v1199, 1030
          %vm1328 = vcmp.lt.s32.totalorder %v1200, 1030
          %vm1329 = vcmp.lt.s32.totalorder %v1201, 1030
          %vm1330 = vcmp.lt.s32.totalorder %v1202, 1030
          %vm1331 = vcmp.lt.s32.totalorder %v1203, 1030
          %vm1332 = vcmp.lt.s32.totalorder %v1204, 1030
          %vm1333 = vcmp.lt.s32.totalorder %v1205, 1030
          %vm1334 = vcmp.lt.s32.totalorder %v1206, 1030
          %vm1335 = vcmp.lt.s32.totalorder %v1207, 1030
          %v1336 = vsel %vm1208, 1, 0
          %v1337 = vsel %vm1209, 1, 0
          %v1338 = vsel %vm1210, 1, 0
          %v1339 = vsel %vm1211, 1, 0
          %v1340 = vsel %vm1212, 1, 0
          %v1341 = vsel %vm1213, 1, 0
          %v1342 = vsel %vm1214, 1, 0
          %v1343 = vsel %vm1215, 1, 0
          %v1344 = vsel %vm1216, 1, 0
          %v1345 = vsel %vm1217, 1, 0
          %v1346 = vsel %vm1218, 1, 0
          %v1347 = vsel %vm1219, 1, 0
          %v1348 = vsel %vm1220, 1, 0
          %v1349 = vsel %vm1221, 1, 0
          %v1350 = vsel %vm1222, 1, 0
          %v1351 = vsel %vm1223, 1, 0
          %v1352 = vsel %vm1224, 1, 0
          %v1353 = vsel %vm1225, 1, 0
          %v1354 = vsel %vm1226, 1, 0
          %v1355 = vsel %vm1227, 1, 0
          %v1356 = vsel %vm1228, 1, 0
          %v1357 = vsel %vm1229, 1, 0
          %v1358 = vsel %vm1230, 1, 0
          %v1359 = vsel %vm1231, 1, 0
          %v1360 = vsel %vm1232, 1, 0
          %v1361 = vsel %vm1233, 1, 0
          %v1362 = vsel %vm1234, 1, 0
          %v1363 = vsel %vm1235, 1, 0
          %v1364 = vsel %vm1236, 1, 0
          %v1365 = vsel %vm1237, 1, 0
          %v1366 = vsel %vm1238, 1, 0
          %v1367 = vsel %vm1239, 1, 0
          %v1368 = vsel %vm1240, 1, 0
          %v1369 = vsel %vm1241, 1, 0
          %v1370 = vsel %vm1242, 1, 0
          %v1371 = vsel %vm1243, 1, 0
          %v1372 = vsel %vm1244, 1, 0
          %v1373 = vsel %vm1245, 1, 0
          %v1374 = vsel %vm1246, 1, 0
          %v1375 = vsel %vm1247, 1, 0
          %v1376 = vsel %vm1248, 1, 0
          %v1377 = vsel %vm1249, 1, 0
          %v1378 = vsel %vm1250, 1, 0
          %v1379 = vsel %vm1251, 1, 0
          %v1380 = vsel %vm1252, 1, 0
          %v1381 = vsel %vm1253, 1, 0
          %v1382 = vsel %vm1254, 1, 0
          %v1383 = vsel %vm1255, 1, 0
          %v1384 = vsel %vm1256, 1, 0
          %v1385 = vsel %vm1257, 1, 0
          %v1386 = vsel %vm1258, 1, 0
          %v1387 = vsel %vm1259, 1, 0
          %v1388 = vsel %vm1260, 1, 0
          %v1389 = vsel %vm1261, 1, 0
          %v1390 = vsel %vm1262, 1, 0
          %v1391 = vsel %vm1263, 1, 0
          %v1392 = vsel %vm1264, 1, 0
          %v1393 = vsel %vm1265, 1, 0
          %v1394 = vsel %vm1266, 1, 0
          %v1395 = vsel %vm1267, 1, 0
          %v1396 = vsel %vm1268, 1, 0
          %v1397 = vsel %vm1269, 1, 0
          %v1398 = vsel %vm1270, 1, 0
          %v1399 = vsel %vm1271, 1, 0
          %v1400 = vsel %vm1272, 1, 0
          %v1401 = vsel %vm1273, 1, 0
          %v1402 = vsel %vm1274, 1, 0
          %v1403 = vsel %vm1275, 1, 0
          %v1404 = vsel %vm1276, 1, 0
          %v1405 = vsel %vm1277, 1, 0
          %v1406 = vsel %vm1278, 1, 0
          %v1407 = vsel %vm1279, 1, 0
          %v1408 = vsel %vm1280, 1, 0
          %v1409 = vsel %vm1281, 1, 0
          %v1410 = vsel %vm1282, 1, 0
          %v1411 = vsel %vm1283, 1, 0
          %v1412 = vsel %vm1284, 1, 0
          %v1413 = vsel %vm1285, 1, 0
          %v1414 = vsel %vm1286, 1, 0
          %v1415 = vsel %vm1287, 1, 0
          %v1416 = vsel %vm1288, 1, 0
          %v1417 = vsel %vm1289, 1, 0
          %v1418 = vsel %vm1290, 1, 0
          %v1419 = vsel %vm1291, 1, 0
          %v1420 = vsel %vm1292, 1, 0
          %v1421 = vsel %vm1293, 1, 0
          %v1422 = vsel %vm1294, 1, 0
          %v1423 = vsel %vm1295, 1, 0
          %v1424 = vsel %vm1296, 1, 0
          %v1425 = vsel %vm1297, 1, 0
          %v1426 = vsel %vm1298, 1, 0
          %v1427 = vsel %vm1299, 1, 0
          %v1428 = vsel %vm1300, 1, 0
          %v1429 = vsel %vm1301, 1, 0
          %v1430 = vsel %vm1302, 1, 0
          %v1431 = vsel %vm1303, 1, 0
          %v1432 = vsel %vm1304, 1, 0
          %v1433 = vsel %vm1305, 1, 0
          %v1434 = vsel %vm1306, 1, 0
          %v1435 = vsel %vm1307, 1, 0
          %v1436 = vsel %vm1308, 1, 0
          %v1437 = vsel %vm1309, 1, 0
          %v1438 = vsel %vm1310, 1, 0
          %v1439 = vsel %vm1311, 1, 0
          %v1440 = vsel %vm1312, 1, 0
          %v1441 = vsel %vm1313, 1, 0
          %v1442 = vsel %vm1314, 1, 0
          %v1443 = vsel %vm1315, 1, 0
          %v1444 = vsel %vm1316, 1, 0
          %v1445 = vsel %vm1317, 1, 0
          %v1446 = vsel %vm1318, 1, 0
          %v1447 = vsel %vm1319, 1, 0
          %v1448 = vsel %vm1320, 1, 0
          %v1449 = vsel %vm1321, 1, 0
          %v1450 = vsel %vm1322, 1, 0
          %v1451 = vsel %vm1323, 1, 0
          %v1452 = vsel %vm1324, 1, 0
          %v1453 = vsel %vm1325, 1, 0
          %v1454 = vsel %vm1326, 1, 0
          %v1455 = vsel %vm1327, 1, 0
          %v1456 = vsel %vm1328, 1, 0
          %v1457 = vsel %vm1329, 1, 0
          %v1458 = vsel %vm1330, 1, 0
          %v1459 = vsel %vm1331, 1, 0
          %v1460 = vsel %vm1332, 1, 0
          %v1461 = vsel %vm1333, 1, 0
          %v1462 = vsel %vm1334, 1, 0
          %v1463 = vsel %vm1335, 1, 0
          %vm1464 = vcmp.eq.s32.totalorder %v1336, 1
          %vm1465 = vcmp.eq.s32.totalorder %v1337, 1
          %vm1466 = vcmp.eq.s32.totalorder %v1338, 1
          %vm1467 = vcmp.eq.s32.totalorder %v1339, 1
          %vm1468 = vcmp.eq.s32.totalorder %v1340, 1
          %vm1469 = vcmp.eq.s32.totalorder %v1341, 1
          %vm1470 = vcmp.eq.s32.totalorder %v1342, 1
          %vm1471 = vcmp.eq.s32.totalorder %v1343, 1
          %vm1472 = vcmp.eq.s32.totalorder %v1344, 1
          %vm1473 = vcmp.eq.s32.totalorder %v1345, 1
          %vm1474 = vcmp.eq.s32.totalorder %v1346, 1
          %vm1475 = vcmp.eq.s32.totalorder %v1347, 1
          %vm1476 = vcmp.eq.s32.totalorder %v1348, 1
          %vm1477 = vcmp.eq.s32.totalorder %v1349, 1
          %vm1478 = vcmp.eq.s32.totalorder %v1350, 1
          %vm1479 = vcmp.eq.s32.totalorder %v1351, 1
          %vm1480 = vcmp.eq.s32.totalorder %v1352, 1
          %vm1481 = vcmp.eq.s32.totalorder %v1353, 1
          %vm1482 = vcmp.eq.s32.totalorder %v1354, 1
          %vm1483 = vcmp.eq.s32.totalorder %v1355, 1
          %vm1484 = vcmp.eq.s32.totalorder %v1356, 1
          %vm1485 = vcmp.eq.s32.totalorder %v1357, 1
          %vm1486 = vcmp.eq.s32.totalorder %v1358, 1
          %vm1487 = vcmp.eq.s32.totalorder %v1359, 1
          %vm1488 = vcmp.eq.s32.totalorder %v1360, 1
          %vm1489 = vcmp.eq.s32.totalorder %v1361, 1
          %vm1490 = vcmp.eq.s32.totalorder %v1362, 1
          %vm1491 = vcmp.eq.s32.totalorder %v1363, 1
          %vm1492 = vcmp.eq.s32.totalorder %v1364, 1
          %vm1493 = vcmp.eq.s32.totalorder %v1365, 1
          %vm1494 = vcmp.eq.s32.totalorder %v1366, 1
          %vm1495 = vcmp.eq.s32.totalorder %v1367, 1
          %vm1496 = vcmp.eq.s32.totalorder %v1368, 1
          %vm1497 = vcmp.eq.s32.totalorder %v1369, 1
          %vm1498 = vcmp.eq.s32.totalorder %v1370, 1
          %vm1499 = vcmp.eq.s32.totalorder %v1371, 1
          %vm1500 = vcmp.eq.s32.totalorder %v1372, 1
          %vm1501 = vcmp.eq.s32.totalorder %v1373, 1
          %vm1502 = vcmp.eq.s32.totalorder %v1374, 1
          %vm1503 = vcmp.eq.s32.totalorder %v1375, 1
          %vm1504 = vcmp.eq.s32.totalorder %v1376, 1
          %vm1505 = vcmp.eq.s32.totalorder %v1377, 1
          %vm1506 = vcmp.eq.s32.totalorder %v1378, 1
          %vm1507 = vcmp.eq.s32.totalorder %v1379, 1
          %vm1508 = vcmp.eq.s32.totalorder %v1380, 1
          %vm1509 = vcmp.eq.s32.totalorder %v1381, 1
          %vm1510 = vcmp.eq.s32.totalorder %v1382, 1
          %vm1511 = vcmp.eq.s32.totalorder %v1383, 1
          %vm1512 = vcmp.eq.s32.totalorder %v1384, 1
          %vm1513 = vcmp.eq.s32.totalorder %v1385, 1
          %vm1514 = vcmp.eq.s32.totalorder %v1386, 1
          %vm1515 = vcmp.eq.s32.totalorder %v1387, 1
          %vm1516 = vcmp.eq.s32.totalorder %v1388, 1
          %vm1517 = vcmp.eq.s32.totalorder %v1389, 1
          %vm1518 = vcmp.eq.s32.totalorder %v1390, 1
          %vm1519 = vcmp.eq.s32.totalorder %v1391, 1
          %vm1520 = vcmp.eq.s32.totalorder %v1392, 1
          %vm1521 = vcmp.eq.s32.totalorder %v1393, 1
          %vm1522 = vcmp.eq.s32.totalorder %v1394, 1
          %vm1523 = vcmp.eq.s32.totalorder %v1395, 1
          %vm1524 = vcmp.eq.s32.totalorder %v1396, 1
          %vm1525 = vcmp.eq.s32.totalorder %v1397, 1
          %vm1526 = vcmp.eq.s32.totalorder %v1398, 1
          %vm1527 = vcmp.eq.s32.totalorder %v1399, 1
          %vm1528 = vcmp.eq.s32.totalorder %v1400, 1
          %vm1529 = vcmp.eq.s32.totalorder %v1401, 1
          %vm1530 = vcmp.eq.s32.totalorder %v1402, 1
          %vm1531 = vcmp.eq.s32.totalorder %v1403, 1
          %vm1532 = vcmp.eq.s32.totalorder %v1404, 1
          %vm1533 = vcmp.eq.s32.totalorder %v1405, 1
          %vm1534 = vcmp.eq.s32.totalorder %v1406, 1
          %vm1535 = vcmp.eq.s32.totalorder %v1407, 1
          %vm1536 = vcmp.eq.s32.totalorder %v1408, 1
          %vm1537 = vcmp.eq.s32.totalorder %v1409, 1
          %vm1538 = vcmp.eq.s32.totalorder %v1410, 1
          %vm1539 = vcmp.eq.s32.totalorder %v1411, 1
          %vm1540 = vcmp.eq.s32.totalorder %v1412, 1
          %vm1541 = vcmp.eq.s32.totalorder %v1413, 1
          %vm1542 = vcmp.eq.s32.totalorder %v1414, 1
          %vm1543 = vcmp.eq.s32.totalorder %v1415, 1
          %vm1544 = vcmp.eq.s32.totalorder %v1416, 1
          %vm1545 = vcmp.eq.s32.totalorder %v1417, 1
          %vm1546 = vcmp.eq.s32.totalorder %v1418, 1
          %vm1547 = vcmp.eq.s32.totalorder %v1419, 1
          %vm1548 = vcmp.eq.s32.totalorder %v1420, 1
          %vm1549 = vcmp.eq.s32.totalorder %v1421, 1
          %vm1550 = vcmp.eq.s32.totalorder %v1422, 1
          %vm1551 = vcmp.eq.s32.totalorder %v1423, 1
          %vm1552 = vcmp.eq.s32.totalorder %v1424, 1
          %vm1553 = vcmp.eq.s32.totalorder %v1425, 1
          %vm1554 = vcmp.eq.s32.totalorder %v1426, 1
          %vm1555 = vcmp.eq.s32.totalorder %v1427, 1
          %vm1556 = vcmp.eq.s32.totalorder %v1428, 1
          %vm1557 = vcmp.eq.s32.totalorder %v1429, 1
          %vm1558 = vcmp.eq.s32.totalorder %v1430, 1
          %vm1559 = vcmp.eq.s32.totalorder %v1431, 1
          %vm1560 = vcmp.eq.s32.totalorder %v1432, 1
          %vm1561 = vcmp.eq.s32.totalorder %v1433, 1
          %vm1562 = vcmp.eq.s32.totalorder %v1434, 1
          %vm1563 = vcmp.eq.s32.totalorder %v1435, 1
          %vm1564 = vcmp.eq.s32.totalorder %v1436, 1
          %vm1565 = vcmp.eq.s32.totalorder %v1437, 1
          %vm1566 = vcmp.eq.s32.totalorder %v1438, 1
          %vm1567 = vcmp.eq.s32.totalorder %v1439, 1
          %vm1568 = vcmp.eq.s32.totalorder %v1440, 1
          %vm1569 = vcmp.eq.s32.totalorder %v1441, 1
          %vm1570 = vcmp.eq.s32.totalorder %v1442, 1
          %vm1571 = vcmp.eq.s32.totalorder %v1443, 1
          %vm1572 = vcmp.eq.s32.totalorder %v1444, 1
          %vm1573 = vcmp.eq.s32.totalorder %v1445, 1
          %vm1574 = vcmp.eq.s32.totalorder %v1446, 1
          %vm1575 = vcmp.eq.s32.totalorder %v1447, 1
          %vm1576 = vcmp.eq.s32.totalorder %v1448, 1
          %vm1577 = vcmp.eq.s32.totalorder %v1449, 1
          %vm1578 = vcmp.eq.s32.totalorder %v1450, 1
          %vm1579 = vcmp.eq.s32.totalorder %v1451, 1
          %vm1580 = vcmp.eq.s32.totalorder %v1452, 1
          %vm1581 = vcmp.eq.s32.totalorder %v1453, 1
          %vm1582 = vcmp.eq.s32.totalorder %v1454, 1
          %vm1583 = vcmp.eq.s32.totalorder %v1455, 1
          %vm1584 = vcmp.eq.s32.totalorder %v1456, 1
          %vm1585 = vcmp.eq.s32.totalorder %v1457, 1
          %vm1586 = vcmp.eq.s32.totalorder %v1458, 1
          %vm1587 = vcmp.eq.s32.totalorder %v1459, 1
          %vm1588 = vcmp.eq.s32.totalorder %v1460, 1
          %vm1589 = vcmp.eq.s32.totalorder %v1461, 1
          %vm1590 = vcmp.eq.s32.totalorder %v1462, 1
          %vm1591 = vcmp.eq.s32.totalorder %v1463, 1
          %v1592 = vsel %vm1464, %v693, 0.0
          %v1593 = vsel %vm1464, %v694, 0.0
          %v1594 = vsel %vm1465, %v695, 0.0
          %v1595 = vsel %vm1465, %v696, 0.0
          %v1596 = vsel %vm1466, %v697, 0.0
          %v1597 = vsel %vm1466, %v698, 0.0
          %v1598 = vsel %vm1467, %v699, 0.0
          %v1599 = vsel %vm1467, %v700, 0.0
          %v1600 = vsel %vm1468, %v701, 0.0
          %v1601 = vsel %vm1468, %v702, 0.0
          %v1602 = vsel %vm1469, %v703, 0.0
          %v1603 = vsel %vm1469, %v704, 0.0
          %v1604 = vsel %vm1470, %v705, 0.0
          %v1605 = vsel %vm1470, %v706, 0.0
          %v1606 = vsel %vm1471, %v707, 0.0
          %v1607 = vsel %vm1471, %v708, 0.0
          %v1608 = vsel %vm1472, %v709, 0.0
          %v1609 = vsel %vm1472, %v710, 0.0
          %v1610 = vsel %vm1473, %v711, 0.0
          %v1611 = vsel %vm1473, %v712, 0.0
          %v1612 = vsel %vm1474, %v713, 0.0
          %v1613 = vsel %vm1474, %v714, 0.0
          %v1614 = vsel %vm1475, %v715, 0.0
          %v1615 = vsel %vm1475, %v716, 0.0
          %v1616 = vsel %vm1476, %v717, 0.0
          %v1617 = vsel %vm1476, %v718, 0.0
          %v1618 = vsel %vm1477, %v719, 0.0
          %v1619 = vsel %vm1477, %v720, 0.0
          %v1620 = vsel %vm1478, %v721, 0.0
          %v1621 = vsel %vm1478, %v722, 0.0
          %v1622 = vsel %vm1479, %v723, 0.0
          %v1623 = vsel %vm1479, %v724, 0.0
          %v1624 = vsel %vm1480, %v725, 0.0
          %v1625 = vsel %vm1480, %v726, 0.0
          %v1626 = vsel %vm1481, %v727, 0.0
          %v1627 = vsel %vm1481, %v728, 0.0
          %v1628 = vsel %vm1482, %v729, 0.0
          %v1629 = vsel %vm1482, %v730, 0.0
          %v1630 = vsel %vm1483, %v731, 0.0
          %v1631 = vsel %vm1483, %v732, 0.0
          %v1632 = vsel %vm1484, %v733, 0.0
          %v1633 = vsel %vm1484, %v734, 0.0
          %v1634 = vsel %vm1485, %v735, 0.0
          %v1635 = vsel %vm1485, %v736, 0.0
          %v1636 = vsel %vm1486, %v737, 0.0
          %v1637 = vsel %vm1486, %v738, 0.0
          %v1638 = vsel %vm1487, %v739, 0.0
          %v1639 = vsel %vm1487, %v740, 0.0
          %v1640 = vsel %vm1488, %v741, 0.0
          %v1641 = vsel %vm1488, %v742, 0.0
          %v1642 = vsel %vm1489, %v743, 0.0
          %v1643 = vsel %vm1489, %v744, 0.0
          %v1644 = vsel %vm1490, %v745, 0.0
          %v1645 = vsel %vm1490, %v746, 0.0
          %v1646 = vsel %vm1491, %v747, 0.0
          %v1647 = vsel %vm1491, %v748, 0.0
          %v1648 = vsel %vm1492, %v749, 0.0
          %v1649 = vsel %vm1492, %v750, 0.0
          %v1650 = vsel %vm1493, %v751, 0.0
          %v1651 = vsel %vm1493, %v752, 0.0
          %v1652 = vsel %vm1494, %v753, 0.0
          %v1653 = vsel %vm1494, %v754, 0.0
          %v1654 = vsel %vm1495, %v755, 0.0
          %v1655 = vsel %vm1495, %v756, 0.0
          %v1656 = vsel %vm1496, %v757, 0.0
          %v1657 = vsel %vm1496, %v758, 0.0
          %v1658 = vsel %vm1497, %v759, 0.0
          %v1659 = vsel %vm1497, %v760, 0.0
          %v1660 = vsel %vm1498, %v761, 0.0
          %v1661 = vsel %vm1498, %v762, 0.0
          %v1662 = vsel %vm1499, %v763, 0.0
          %v1663 = vsel %vm1499, %v764, 0.0
          %v1664 = vsel %vm1500, %v765, 0.0
          %v1665 = vsel %vm1500, %v766, 0.0
          %v1666 = vsel %vm1501, %v767, 0.0
          %v1667 = vsel %vm1501, %v768, 0.0
          %v1668 = vsel %vm1502, %v769, 0.0
          %v1669 = vsel %vm1502, %v770, 0.0
          %v1670 = vsel %vm1503, %v771, 0.0
          %v1671 = vsel %vm1503, %v772, 0.0
          %v1672 = vsel %vm1504, %v773, 0.0
          %v1673 = vsel %vm1504, %v774, 0.0
          %v1674 = vsel %vm1505, %v775, 0.0
          %v1675 = vsel %vm1505, %v776, 0.0
          %v1676 = vsel %vm1506, %v777, 0.0
          %v1677 = vsel %vm1506, %v778, 0.0
          %v1678 = vsel %vm1507, %v779, 0.0
          %v1679 = vsel %vm1507, %v780, 0.0
          %v1680 = vsel %vm1508, %v781, 0.0
          %v1681 = vsel %vm1508, %v782, 0.0
          %v1682 = vsel %vm1509, %v783, 0.0
          %v1683 = vsel %vm1509, %v784, 0.0
          %v1684 = vsel %vm1510, %v785, 0.0
          %v1685 = vsel %vm1510, %v786, 0.0
          %v1686 = vsel %vm1511, %v787, 0.0
          %v1687 = vsel %vm1511, %v788, 0.0
          %v1688 = vsel %vm1512, %v789, 0.0
          %v1689 = vsel %vm1512, %v790, 0.0
          %v1690 = vsel %vm1513, %v791, 0.0
          %v1691 = vsel %vm1513, %v792, 0.0
          %v1692 = vsel %vm1514, %v793, 0.0
          %v1693 = vsel %vm1514, %v794, 0.0
          %v1694 = vsel %vm1515, %v795, 0.0
          %v1695 = vsel %vm1515, %v796, 0.0
          %v1696 = vsel %vm1516, %v797, 0.0
          %v1697 = vsel %vm1516, %v798, 0.0
          %v1698 = vsel %vm1517, %v799, 0.0
          %v1699 = vsel %vm1517, %v800, 0.0
          %v1700 = vsel %vm1518, %v801, 0.0
          %v1701 = vsel %vm1518, %v802, 0.0
          %v1702 = vsel %vm1519, %v803, 0.0
          %v1703 = vsel %vm1519, %v804, 0.0
          %v1704 = vsel %vm1520, %v805, 0.0
          %v1705 = vsel %vm1520, %v806, 0.0
          %v1706 = vsel %vm1521, %v807, 0.0
          %v1707 = vsel %vm1521, %v808, 0.0
          %v1708 = vsel %vm1522, %v809, 0.0
          %v1709 = vsel %vm1522, %v810, 0.0
          %v1710 = vsel %vm1523, %v811, 0.0
          %v1711 = vsel %vm1523, %v812, 0.0
          %v1712 = vsel %vm1524, %v813, 0.0
          %v1713 = vsel %vm1524, %v814, 0.0
          %v1714 = vsel %vm1525, %v815, 0.0
          %v1715 = vsel %vm1525, %v816, 0.0
          %v1716 = vsel %vm1526, %v817, 0.0
          %v1717 = vsel %vm1526, %v818, 0.0
          %v1718 = vsel %vm1527, %v819, 0.0
          %v1719 = vsel %vm1527, %v820, 0.0
          %v1720 = vsel %vm1528, %v821, 0.0
          %v1721 = vsel %vm1528, %v822, 0.0
          %v1722 = vsel %vm1529, %v823, 0.0
          %v1723 = vsel %vm1529, %v824, 0.0
          %v1724 = vsel %vm1530, %v825, 0.0
          %v1725 = vsel %vm1530, %v826, 0.0
          %v1726 = vsel %vm1531, %v827, 0.0
          %v1727 = vsel %vm1531, %v828, 0.0
          %v1728 = vsel %vm1532, %v829, 0.0
          %v1729 = vsel %vm1532, %v830, 0.0
          %v1730 = vsel %vm1533, %v831, 0.0
          %v1731 = vsel %vm1533, %v832, 0.0
          %v1732 = vsel %vm1534, %v833, 0.0
          %v1733 = vsel %vm1534, %v834, 0.0
          %v1734 = vsel %vm1535, %v835, 0.0
          %v1735 = vsel %vm1535, %v836, 0.0
          %v1736 = vsel %vm1536, %v837, 0.0
          %v1737 = vsel %vm1536, %v838, 0.0
          %v1738 = vsel %vm1537, %v839, 0.0
          %v1739 = vsel %vm1537, %v840, 0.0
          %v1740 = vsel %vm1538, %v841, 0.0
          %v1741 = vsel %vm1538, %v842, 0.0
          %v1742 = vsel %vm1539, %v843, 0.0
          %v1743 = vsel %vm1539, %v844, 0.0
          %v1744 = vsel %vm1540, %v845, 0.0
          %v1745 = vsel %vm1540, %v846, 0.0
          %v1746 = vsel %vm1541, %v847, 0.0
          %v1747 = vsel %vm1541, %v848, 0.0
          %v1748 = vsel %vm1542, %v849, 0.0
          %v1749 = vsel %vm1542, %v850, 0.0
          %v1750 = vsel %vm1543, %v851, 0.0
          %v1751 = vsel %vm1543, %v852, 0.0
          %v1752 = vsel %vm1544, %v853, 0.0
          %v1753 = vsel %vm1544, %v854, 0.0
          %v1754 = vsel %vm1545, %v855, 0.0
          %v1755 = vsel %vm1545, %v856, 0.0
          %v1756 = vsel %vm1546, %v857, 0.0
          %v1757 = vsel %vm1546, %v858, 0.0
          %v1758 = vsel %vm1547, %v859, 0.0
          %v1759 = vsel %vm1547, %v860, 0.0
          %v1760 = vsel %vm1548, %v861, 0.0
          %v1761 = vsel %vm1548, %v862, 0.0
          %v1762 = vsel %vm1549, %v863, 0.0
          %v1763 = vsel %vm1549, %v864, 0.0
          %v1764 = vsel %vm1550, %v865, 0.0
          %v1765 = vsel %vm1550, %v866, 0.0
          %v1766 = vsel %vm1551, %v867, 0.0
          %v1767 = vsel %vm1551, %v868, 0.0
          %v1768 = vsel %vm1552, %v869, 0.0
          %v1769 = vsel %vm1552, %v870, 0.0
          %v1770 = vsel %vm1553, %v871, 0.0
          %v1771 = vsel %vm1553, %v872, 0.0
          %v1772 = vsel %vm1554, %v873, 0.0
          %v1773 = vsel %vm1554, %v874, 0.0
          %v1774 = vsel %vm1555, %v875, 0.0
          %v1775 = vsel %vm1555, %v876, 0.0
          %v1776 = vsel %vm1556, %v877, 0.0
          %v1777 = vsel %vm1556, %v878, 0.0
          %v1778 = vsel %vm1557, %v879, 0.0
          %v1779 = vsel %vm1557, %v880, 0.0
          %v1780 = vsel %vm1558, %v881, 0.0
          %v1781 = vsel %vm1558, %v882, 0.0
          %v1782 = vsel %vm1559, %v883, 0.0
          %v1783 = vsel %vm1559, %v884, 0.0
          %v1784 = vsel %vm1560, %v885, 0.0
          %v1785 = vsel %vm1560, %v886, 0.0
          %v1786 = vsel %vm1561, %v887, 0.0
          %v1787 = vsel %vm1561, %v888, 0.0
          %v1788 = vsel %vm1562, %v889, 0.0
          %v1789 = vsel %vm1562, %v890, 0.0
          %v1790 = vsel %vm1563, %v891, 0.0
          %v1791 = vsel %vm1563, %v892, 0.0
          %v1792 = vsel %vm1564, %v893, 0.0
          %v1793 = vsel %vm1564, %v894, 0.0
          %v1794 = vsel %vm1565, %v895, 0.0
          %v1795 = vsel %vm1565, %v896, 0.0
          %v1796 = vsel %vm1566, %v897, 0.0
          %v1797 = vsel %vm1566, %v898, 0.0
          %v1798 = vsel %vm1567, %v899, 0.0
          %v1799 = vsel %vm1567, %v900, 0.0
          %v1800 = vsel %vm1568, %v901, 0.0
          %v1801 = vsel %vm1568, %v902, 0.0
          %v1802 = vsel %vm1569, %v903, 0.0
          %v1803 = vsel %vm1569, %v904, 0.0
          %v1804 = vsel %vm1570, %v905, 0.0
          %v1805 = vsel %vm1570, %v906, 0.0
          %v1806 = vsel %vm1571, %v907, 0.0
          %v1807 = vsel %vm1571, %v908, 0.0
          %v1808 = vsel %vm1572, %v909, 0.0
          %v1809 = vsel %vm1572, %v910, 0.0
          %v1810 = vsel %vm1573, %v911, 0.0
          %v1811 = vsel %vm1573, %v912, 0.0
          %v1812 = vsel %vm1574, %v913, 0.0
          %v1813 = vsel %vm1574, %v914, 0.0
          %v1814 = vsel %vm1575, %v915, 0.0
          %v1815 = vsel %vm1575, %v916, 0.0
          %v1816 = vsel %vm1576, %v917, 0.0
          %v1817 = vsel %vm1576, %v918, 0.0
          %v1818 = vsel %vm1577, %v919, 0.0
          %v1819 = vsel %vm1577, %v920, 0.0
          %v1820 = vsel %vm1578, %v921, 0.0
          %v1821 = vsel %vm1578, %v922, 0.0
          %v1822 = vsel %vm1579, %v923, 0.0
          %v1823 = vsel %vm1579, %v924, 0.0
          %v1824 = vsel %vm1580, %v925, 0.0
          %v1825 = vsel %vm1580, %v926, 0.0
          %v1826 = vsel %vm1581, %v927, 0.0
          %v1827 = vsel %vm1581, %v928, 0.0
          %v1828 = vsel %vm1582, %v929, 0.0
          %v1829 = vsel %vm1582, %v930, 0.0
          %v1830 = vsel %vm1583, %v931, 0.0
          %v1831 = vsel %vm1583, %v932, 0.0
          %v1832 = vsel %vm1584, %v933, 0.0
          %v1833 = vsel %vm1584, %v934, 0.0
          %v1834 = vsel %vm1585, %v935, 0.0
          %v1835 = vsel %vm1585, %v936, 0.0
          %v1836 = vsel %vm1586, %v937, 0.0
          %v1837 = vsel %vm1586, %v938, 0.0
          %v1838 = vsel %vm1587, %v939, 0.0
          %v1839 = vsel %vm1587, %v940, 0.0
          %v1840 = vsel %vm1588, %v941, 0.0
          %v1841 = vsel %vm1588, %v942, 0.0
          %v1842 = vsel %vm1589, %v943, 0.0
          %v1843 = vsel %vm1589, %v944, 0.0
          %v1844 = vsel %vm1590, %v945, 0.0
          %v1845 = vsel %vm1590, %v946, 0.0
          %v1846 = vsel %vm1591, %v947, 0.0
          %v1847 = vsel %vm1591, %v948, 0.0
          %v1848 = vld [vmem:[#allocation2] sm:$0xff]
          %v1849 = vld [vmem:[#allocation2 + $0x8] sm:$0xff]
          %v1850 = vadd.f32 %v1592, %v1594
          %v1851 = vadd.f32 %v1850, %v1596
          %v1852 = vadd.f32 %v1851, %v1598
          %v1853 = vadd.f32 %v1852, %v1600
          %v1854 = vadd.f32 %v1853, %v1602
          %v1855 = vadd.f32 %v1854, %v1604
          %v1856 = vadd.f32 %v1855, %v1606
          %v1857 = vadd.f32 %v1856, %v1608
          %v1858 = vadd.f32 %v1857, %v1610
          %v1859 = vadd.f32 %v1858, %v1612
          %v1860 = vadd.f32 %v1859, %v1614
          %v1861 = vadd.f32 %v1860, %v1616
          %v1862 = vadd.f32 %v1861, %v1618
          %v1863 = vadd.f32 %v1862, %v1620
          %v1864 = vadd.f32 %v1863, %v1622
          %v1865 = vadd.f32 %v1864, %v1624
          %v1866 = vadd.f32 %v1865, %v1626
          %v1867 = vadd.f32 %v1866, %v1628
          %v1868 = vadd.f32 %v1867, %v1630
          %v1869 = vadd.f32 %v1868, %v1632
          %v1870 = vadd.f32 %v1869, %v1634
          %v1871 = vadd.f32 %v1870, %v1636
          %v1872 = vadd.f32 %v1871, %v1638
          %v1873 = vadd.f32 %v1872, %v1640
          %v1874 = vadd.f32 %v1873, %v1642
          %v1875 = vadd.f32 %v1874, %v1644
          %v1876 = vadd.f32 %v1875, %v1646
          %v1877 = vadd.f32 %v1876, %v1648
          %v1878 = vadd.f32 %v1877, %v1650
          %v1879 = vadd.f32 %v1878, %v1652
          %v1880 = vadd.f32 %v1879, %v1654
          %v1881 = vadd.f32 %v1880, %v1656
          %v1882 = vadd.f32 %v1881, %v1658
          %v1883 = vadd.f32 %v1882, %v1660
          %v1884 = vadd.f32 %v1883, %v1662
          %v1885 = vadd.f32 %v1884, %v1664
          %v1886 = vadd.f32 %v1885, %v1666
          %v1887 = vadd.f32 %v1886, %v1668
          %v1888 = vadd.f32 %v1887, %v1670
          %v1889 = vadd.f32 %v1888, %v1672
          %v1890 = vadd.f32 %v1889, %v1674
          %v1891 = vadd.f32 %v1890, %v1676
          %v1892 = vadd.f32 %v1891, %v1678
          %v1893 = vadd.f32 %v1892, %v1680
          %v1894 = vadd.f32 %v1893, %v1682
          %v1895 = vadd.f32 %v1894, %v1684
          %v1896 = vadd.f32 %v1895, %v1686
          %v1897 = vadd.f32 %v1896, %v1688
          %v1898 = vadd.f32 %v1897, %v1690
          %v1899 = vadd.f32 %v1898, %v1692
          %v1900 = vadd.f32 %v1899, %v1694
          %v1901 = vadd.f32 %v1900, %v1696
          %v1902 = vadd.f32 %v1901, %v1698
          %v1903 = vadd.f32 %v1902, %v1700
          %v1904 = vadd.f32 %v1903, %v1702
          %v1905 = vadd.f32 %v1904, %v1704
          %v1906 = vadd.f32 %v1905, %v1706
          %v1907 = vadd.f32 %v1906, %v1708
          %v1908 = vadd.f32 %v1907, %v1710
          %v1909 = vadd.f32 %v1908, %v1712
          %v1910 = vadd.f32 %v1909, %v1714
          %v1911 = vadd.f32 %v1910, %v1716
          %v1912 = vadd.f32 %v1911, %v1718
          %v1913 = vadd.f32 %v1912, %v1720
          %v1914 = vadd.f32 %v1913, %v1722
          %v1915 = vadd.f32 %v1914, %v1724
          %v1916 = vadd.f32 %v1915, %v1726
          %v1917 = vadd.f32 %v1916, %v1728
          %v1918 = vadd.f32 %v1917, %v1730
          %v1919 = vadd.f32 %v1918, %v1732
          %v1920 = vadd.f32 %v1919, %v1734
          %v1921 = vadd.f32 %v1920, %v1736
          %v1922 = vadd.f32 %v1921, %v1738
          %v1923 = vadd.f32 %v1922, %v1740
          %v1924 = vadd.f32 %v1923, %v1742
          %v1925 = vadd.f32 %v1924, %v1744
          %v1926 = vadd.f32 %v1925, %v1746
          %v1927 = vadd.f32 %v1926, %v1748
          %v1928 = vadd.f32 %v1927, %v1750
          %v1929 = vadd.f32 %v1928, %v1752
          %v1930 = vadd.f32 %v1929, %v1754
          %v1931 = vadd.f32 %v1930, %v1756
          %v1932 = vadd.f32 %v1931, %v1758
          %v1933 = vadd.f32 %v1932, %v1760
          %v1934 = vadd.f32 %v1933, %v1762
          %v1935 = vadd.f32 %v1934, %v1764
          %v1936 = vadd.f32 %v1935, %v1766
          %v1937 = vadd.f32 %v1936, %v1768
          %v1938 = vadd.f32 %v1937, %v1770
          %v1939 = vadd.f32 %v1938, %v1772
          %v1940 = vadd.f32 %v1939, %v1774
          %v1941 = vadd.f32 %v1940, %v1776
          %v1942 = vadd.f32 %v1941, %v1778
          %v1943 = vadd.f32 %v1942, %v1780
          %v1944 = vadd.f32 %v1943, %v1782
          %v1945 = vadd.f32 %v1944, %v1784
          %v1946 = vadd.f32 %v1945, %v1786
          %v1947 = vadd.f32 %v1946, %v1788
          %v1948 = vadd.f32 %v1947, %v1790
          %v1949 = vadd.f32 %v1948, %v1792
          %v1950 = vadd.f32 %v1949, %v1794
          %v1951 = vadd.f32 %v1950, %v1796
          %v1952 = vadd.f32 %v1951, %v1798
          %v1953 = vadd.f32 %v1952, %v1800
          %v1954 = vadd.f32 %v1953, %v1802
          %v1955 = vadd.f32 %v1954, %v1804
          %v1956 = vadd.f32 %v1955, %v1806
          %v1957 = vadd.f32 %v1956, %v1808
          %v1958 = vadd.f32 %v1957, %v1810
          %v1959 = vadd.f32 %v1958, %v1812
          %v1960 = vadd.f32 %v1959, %v1814
          %v1961 = vadd.f32 %v1960, %v1816
          %v1962 = vadd.f32 %v1961, %v1818
          %v1963 = vadd.f32 %v1962, %v1820
          %v1964 = vadd.f32 %v1963, %v1822
          %v1965 = vadd.f32 %v1964, %v1824
          %v1966 = vadd.f32 %v1965, %v1826
          %v1967 = vadd.f32 %v1966, %v1828
          %v1968 = vadd.f32 %v1967, %v1830
          %v1969 = vadd.f32 %v1968, %v1832
          %v1970 = vadd.f32 %v1969, %v1834
          %v1971 = vadd.f32 %v1970, %v1836
          %v1972 = vadd.f32 %v1971, %v1838
          %v1973 = vadd.f32 %v1972, %v1840
          %v1974 = vadd.f32 %v1973, %v1842
          %v1975 = vadd.f32 %v1974, %v1844
          %v1976 = vadd.f32 %v1975, %v1846
          %v1977 = vadd.f32 %v1593, %v1595
          %v1978 = vadd.f32 %v1977, %v1597
          %v1979 = vadd.f32 %v1978, %v1599
          %v1980 = vadd.f32 %v1979, %v1601
          %v1981 = vadd.f32 %v1980, %v1603
          %v1982 = vadd.f32 %v1981, %v1605
          %v1983 = vadd.f32 %v1982, %v1607
          %v1984 = vadd.f32 %v1983, %v1609
          %v1985 = vadd.f32 %v1984, %v1611
          %v1986 = vadd.f32 %v1985, %v1613
          %v1987 = vadd.f32 %v1986, %v1615
          %v1988 = vadd.f32 %v1987, %v1617
          %v1989 = vadd.f32 %v1988, %v1619
          %v1990 = vadd.f32 %v1989, %v1621
          %v1991 = vadd.f32 %v1990, %v1623
          %v1992 = vadd.f32 %v1991, %v1625
          %v1993 = vadd.f32 %v1992, %v1627
          %v1994 = vadd.f32 %v1993, %v1629
          %v1995 = vadd.f32 %v1994, %v1631
          %v1996 = vadd.f32 %v1995, %v1633
          %v1997 = vadd.f32 %v1996, %v1635
          %v1998 = vadd.f32 %v1997, %v1637
          %v1999 = vadd.f32 %v1998, %v1639
          %v2000 = vadd.f32 %v1999, %v1641
          %v2001 = vadd.f32 %v2000, %v1643
          %v2002 = vadd.f32 %v2001, %v1645
          %v2003 = vadd.f32 %v2002, %v1647
          %v2004 = vadd.f32 %v2003, %v1649
          %v2005 = vadd.f32 %v2004, %v1651
          %v2006 = vadd.f32 %v2005, %v1653
          %v2007 = vadd.f32 %v2006, %v1655
          %v2008 = vadd.f32 %v2007, %v1657
          %v2009 = vadd.f32 %v2008, %v1659
          %v2010 = vadd.f32 %v2009, %v1661
          %v2011 = vadd.f32 %v2010, %v1663
          %v2012 = vadd.f32 %v2011, %v1665
          %v2013 = vadd.f32 %v2012, %v1667
          %v2014 = vadd.f32 %v2013, %v1669
          %v2015 = vadd.f32 %v2014, %v1671
          %v2016 = vadd.f32 %v2015, %v1673
          %v2017 = vadd.f32 %v2016, %v1675
          %v2018 = vadd.f32 %v2017, %v1677
          %v2019 = vadd.f32 %v2018, %v1679
          %v2020 = vadd.f32 %v2019, %v1681
          %v2021 = vadd.f32 %v2020, %v1683
          %v2022 = vadd.f32 %v2021, %v1685
          %v2023 = vadd.f32 %v2022, %v1687
          %v2024 = vadd.f32 %v2023, %v1689
          %v2025 = vadd.f32 %v2024, %v1691
          %v2026 = vadd.f32 %v2025, %v1693
          %v2027 = vadd.f32 %v2026, %v1695
          %v2028 = vadd.f32 %v2027, %v1697
          %v2029 = vadd.f32 %v2028, %v1699
          %v2030 = vadd.f32 %v2029, %v1701
          %v2031 = vadd.f32 %v2030, %v1703
          %v2032 = vadd.f32 %v2031, %v1705
          %v2033 = vadd.f32 %v2032, %v1707
          %v2034 = vadd.f32 %v2033, %v1709
          %v2035 = vadd.f32 %v2034, %v1711
          %v2036 = vadd.f32 %v2035, %v1713
          %v2037 = vadd.f32 %v2036, %v1715
          %v2038 = vadd.f32 %v2037, %v1717
          %v2039 = vadd.f32 %v2038, %v1719
          %v2040 = vadd.f32 %v2039, %v1721
          %v2041 = vadd.f32 %v2040, %v1723
          %v2042 = vadd.f32 %v2041, %v1725
          %v2043 = vadd.f32 %v2042, %v1727
          %v2044 = vadd.f32 %v2043, %v1729
          %v2045 = vadd.f32 %v2044, %v1731
          %v2046 = vadd.f32 %v2045, %v1733
          %v2047 = vadd.f32 %v2046, %v1735
          %v2048 = vadd.f32 %v2047, %v1737
          %v2049 = vadd.f32 %v2048, %v1739
          %v2050 = vadd.f32 %v2049, %v1741
          %v2051 = vadd.f32 %v2050, %v1743
          %v2052 = vadd.f32 %v2051, %v1745
          %v2053 = vadd.f32 %v2052, %v1747
          %v2054 = vadd.f32 %v2053, %v1749
          %v2055 = vadd.f32 %v2054, %v1751
          %v2056 = vadd.f32 %v2055, %v1753
          %v2057 = vadd.f32 %v2056, %v1755
          %v2058 = vadd.f32 %v2057, %v1757
          %v2059 = vadd.f32 %v2058, %v1759
          %v2060 = vadd.f32 %v2059, %v1761
          %v2061 = vadd.f32 %v2060, %v1763
          %v2062 = vadd.f32 %v2061, %v1765
          %v2063 = vadd.f32 %v2062, %v1767
          %v2064 = vadd.f32 %v2063, %v1769
          %v2065 = vadd.f32 %v2064, %v1771
          %v2066 = vadd.f32 %v2065, %v1773
          %v2067 = vadd.f32 %v2066, %v1775
          %v2068 = vadd.f32 %v2067, %v1777
          %v2069 = vadd.f32 %v2068, %v1779
          %v2070 = vadd.f32 %v2069, %v1781
          %v2071 = vadd.f32 %v2070, %v1783
          %v2072 = vadd.f32 %v2071, %v1785
          %v2073 = vadd.f32 %v2072, %v1787
          %v2074 = vadd.f32 %v2073, %v1789
          %v2075 = vadd.f32 %v2074, %v1791
          %v2076 = vadd.f32 %v2075, %v1793
          %v2077 = vadd.f32 %v2076, %v1795
          %v2078 = vadd.f32 %v2077, %v1797
          %v2079 = vadd.f32 %v2078, %v1799
          %v2080 = vadd.f32 %v2079, %v1801
          %v2081 = vadd.f32 %v2080, %v1803
          %v2082 = vadd.f32 %v2081, %v1805
          %v2083 = vadd.f32 %v2082, %v1807
          %v2084 = vadd.f32 %v2083, %v1809
          %v2085 = vadd.f32 %v2084, %v1811
          %v2086 = vadd.f32 %v2085, %v1813
          %v2087 = vadd.f32 %v2086, %v1815
          %v2088 = vadd.f32 %v2087, %v1817
          %v2089 = vadd.f32 %v2088, %v1819
          %v2090 = vadd.f32 %v2089, %v1821
          %v2091 = vadd.f32 %v2090, %v1823
          %v2092 = vadd.f32 %v2091, %v1825
          %v2093 = vadd.f32 %v2092, %v1827
          %v2094 = vadd.f32 %v2093, %v1829
          %v2095 = vadd.f32 %v2094, %v1831
          %v2096 = vadd.f32 %v2095, %v1833
          %v2097 = vadd.f32 %v2096, %v1835
          %v2098 = vadd.f32 %v2097, %v1837
          %v2099 = vadd.f32 %v2098, %v1839
          %v2100 = vadd.f32 %v2099, %v1841
          %v2101 = vadd.f32 %v2100, %v1843
          %v2102 = vadd.f32 %v2101, %v1845
          %v2103 = vadd.f32 %v2102, %v1847
          %v2104 = vadd.f32 %v1848, %v1976
          %v2105 = vadd.f32 %v1849, %v2103
          %2106 = vst [vmem:[#allocation2] sm:$0xff] %v2104
          %2107 = vst [vmem:[#allocation2 + $0x8] sm:$0xff] %v2105
          %v2108 = vld [vmem:[#allocation2] sm:$0xff]
          %v2109 = vld [vmem:[#allocation2 + $0x8] sm:$0xff]
          %v2110 = vrot.slane %v2108, 4
          %v2111 = vadd.f32 %v2108, %v2110
          %v2112 = vrot.slane %v2111, 2
          %v2113 = vadd.f32 %v2111, %v2112
          %v2114 = vrot.slane %v2113, 1
          %v2115 = vadd.f32 %v2113, %v2114
          %v2116 = vrot.slane %v2109, 4
          %v2117 = vadd.f32 %v2109, %v2116
          %v2118 = vrot.slane %v2117, 2
          %v2119 = vadd.f32 %v2117, %v2118
          %v2120 = vrot.slane %v2119, 1
          %v2121 = vadd.f32 %v2119, %v2120
          %v2122 = vmul.f32 %v2115, 0.0009708738
          %v2123 = vmul.f32 %v2121, 0.0009708738
          %v2126 = vrot.slane %v2123, 7
          %vm2127 = vcmask 1040384
          %v2128 = vsel %vm2127, %v2122, %v2126
          %v2130 = vlaneseq
          %vm2131 = vcmp.ge.s32.totalorder %v2130, 0
          %vm2132 = vcmp.lt.s32.totalorder %v2130, 256
          %vm2133 = vmand %vm2131, %vm2132
          %2134 = vst.msk [vmem:[#allocation6] sm:$0x3] %vm2133, %v2128
        $region40: #{tpu_custom_call.1} parent=23 // pred_fallthru
          _
        // Predicated region
        $region41: #{tpu_custom_call.1} parent=23 // pred_check
          %p2135 = pneg %p74
        $region42: #{tpu_custom_call.1} parent=23 // pred_check_branch
          %2137 = sbr.rel (%p2135) target = $region44
        $region43: #{tpu_custom_call.1} parent=23 // pred_region
          %s2138 = smul.u32 2, %s20
          %2140 = vsyncadd [#allocation5], 0
          %s2141 = scalar_lea.hbm %s1, %s2138
          %s2143 = sshll.u32 [#allocation6], 4
          %s2144 = int_to_ptr.vmem [resolvable:$true] %s2143
          %s2145 = sshll.u32 %s2141, 4
          %s2146 = int_to_ptr.hbm [resolvable:$true] %s2145
          %2148 = dma.vmem_to_hbm [thread:$0]  %s2144, 32, %s2146, [#allocation5]
        $region44: #{tpu_custom_call.1} parent=23 // pred_fallthru
          _
        // Predicated region
        $region45: #{tpu_custom_call.1} parent=23 // pred_check
          %p2149 = pneg %p74
        $region46: #{tpu_custom_call.1} parent=23 // pred_check_branch
          %2151 = sbr.rel (%p2149) target = $region48
        $region47: #{tpu_custom_call.1} parent=23 // pred_region
          %2153 = dma.done [#allocation5], 32
        $region48: #{tpu_custom_call.1} parent=23 // pred_fallthru
          _
      $region24: #{tpu_custom_call.1} parent=5 // pred_fallthru
        _
      %p2154 = scmp.le.s32.totalorder 2, %s11
      // Predicated region
      $region49: #{tpu_custom_call.1} parent=5 // pred_check
        %p2155 = pneg %p2154
      $region50: #{tpu_custom_call.1} parent=5 // pred_check_branch
        %2157 = sbr.rel (%p2155) target = $region52
      $region51: #{tpu_custom_call.1} parent=5 // pred_region
        %s2158 = ssub.s32 %s11, 2
      $region52: #{tpu_custom_call.1} parent=5 // pred_fallthru
        _
    $region6: #{tpu_custom_call.1} parent=1 // loop_footer
      %s15 = sadd.s32 1, %s11
    $region7: #{tpu_custom_call.1} parent=1 // loop_footer_branch
      %10 = sbr.rel target = $region3
    $region8: #{tpu_custom_call.1} parent=1 // loop_exit
      _
    %2159 = vsyncpa [#allocation4], 1
    %s2160 = scalar_lea.sflag [#allocation4], 1
    %2161 = vsyncpa %s2160, 1
    %2162 = vsyncpa [#allocation5], 1
    %s2163 = scalar_lea.sflag [#allocation5], 1
    %2164 = vsyncpa %s2163, 1

</llo_original>
